<compile_context>
chip_gen: v7x
topology: tpu7x:2x2x1
jax: 0.10.0
libtpu: 0.0.40
codegen_flags: <defaults>
</compile_context>

<pallas_src>
import functools
import math

import jax
import jax.numpy as jnp
from jax import lax
from jax.experimental import pallas as pl
from jax.experimental.pallas import tpu as pltpu

_COMPUTE_DTYPE = jnp.bfloat16  # MXU operand / streamed-activation dtype


def _round_up(x, m):
    return ((x + m - 1) // m) * m


@functools.lru_cache(maxsize=None)
def _vmem_limit_bytes():
    """Generation-aware scoped-VMEM budget (≈3/4 of physical, capped at 96 MiB)."""
    try:
        cap = int(pltpu.get_tpu_info().vmem_capacity_bytes)
        return max(32 * 1024 * 1024, min((cap * 3) // 4, 96 * 1024 * 1024))
    except Exception:  # attribute/backend differences -> safe everywhere
        return 48 * 1024 * 1024


# ---------------------------------------------------------------------------
# Tiled linear kernels: grid (M/tm, N/tn, K/tk), f32 accumulator.
# Weights stay in the PyTorch (out_features, in_features) layout; contraction
# is over the last dims so no weight transpose is materialized.  Operands are
# already bf16 (cast once in the wrapper) -> no per-step casts here.
# ---------------------------------------------------------------------------
def _matmul_kernel(x_ref, w_ref, o_ref, acc_ref):
    k = pl.program_id(2)

    @pl.when(k == 0)
    def _():
        acc_ref[...] = jnp.zeros(acc_ref.shape, acc_ref.dtype)

    acc_ref[...] += lax.dot_general(
        x_ref[...], w_ref[...], (((1,), (1,)), ((), ())),
        preferred_element_type=jnp.float32,
    )

    @pl.when(k == pl.num_programs(2) - 1)
    def _():
        o_ref[...] = acc_ref[...].astype(o_ref.dtype)


def _matmul_bias_kernel(x_ref, w_ref, b_ref, o_ref, acc_ref):
    k = pl.program_id(2)

    @pl.when(k == 0)
    def _():
        acc_ref[...] = jnp.zeros(acc_ref.shape, acc_ref.dtype)

    acc_ref[...] += lax.dot_general(
        x_ref[...], w_ref[...], (((1,), (1,)), ((), ())),
        preferred_element_type=jnp.float32,
    )

    @pl.when(k == pl.num_programs(2) - 1)
    def _():
        o_ref[...] = (acc_ref[...] + b_ref[...]).astype(o_ref.dtype)


def _tile_and_pad(size, cap, align):
    """Tile size + padded extent.  size<=cap -> full dim (always legal block);
    otherwise the cap (an `align`-multiple) with the extent padded up."""
    if size <= cap:
        return size, size
    return cap, _round_up(size, cap)


def pallas_linear(x, w, bias=None, *, out_dtype=None,
                  tile_m=512, tile_n=512, tile_k=512):
    """x: (M, K); w: (N, K)  (PyTorch Linear layout, computes x @ w.T); bias: (N,).

    Streams bf16 operands to the MXU, accumulates in f32, stores `out_dtype`
    (default: x.dtype).  Shapes are zero-padded to tile multiples and the
    result sliced back, so no divisor search / odd block shapes are needed.
    """
    M, K = x.shape
    N, K2 = w.shape
    assert K == K2, "weight in_features mismatch"
    out_dtype = out_dtype or x.dtype

    # One-time casts (halve the HBM bytes the kernel DMAs re-stream).
    xb = x.astype(_COMPUTE_DTYPE)
    wb = w.astype(_COMPUTE_DTYPE)

    tm, Mp = _tile_and_pad(M, tile_m, 8)
    tn, Np = _tile_and_pad(N, tile_n, 128)
    tk, Kp = _tile_and_pad(K, tile_k, 128)

    if Mp != M or Kp != K:
        xb = jnp.pad(xb, ((0, Mp - M), (0, Kp - K)))
    if Np != N or Kp != K:
        wb = jnp.pad(wb, ((0, Np - N), (0, Kp - K)))

    grid = (Mp // tm, Np // tn, Kp // tk)

    in_specs = [
        pl.BlockSpec((tm, tk), lambda i, j, k: (i, k)),
        pl.BlockSpec((tn, tk), lambda i, j, k: (j, k)),
    ]
    args = [xb, wb]
    kernel = _matmul_kernel
    bias_bytes = 0
    if bias is not None:
        b2 = bias.reshape(1, N)
        if Np != N:
            b2 = jnp.pad(b2, ((0, 0), (0, Np - N)))
        in_specs.append(pl.BlockSpec((1, tn), lambda i, j, k: (0, j)))
        args.append(b2)
        kernel = _matmul_bias_kernel
        bias_bytes = N * 4

    cost = pl.CostEstimate(
        flops=int(2 * M * N * K),
        transcendentals=0,
        bytes_accessed=int(M * K * 2 + N * K * 2
                           + M * N * jnp.dtype(out_dtype).itemsize + bias_bytes),
    )

    out = pl.pallas_call(
        kernel,
        out_shape=jax.ShapeDtypeStruct((Mp, Np), out_dtype),
        grid_spec=pltpu.PrefetchScalarGridSpec(
            num_scalar_prefetch=0,
            grid=grid,
            in_specs=in_specs,
            out_specs=pl.BlockSpec((tm, tn), lambda i, j, k: (i, j)),
            scratch_shapes=[pltpu.VMEM((tm, tn), jnp.float32)],
        ),
        compiler_params=pltpu.CompilerParams(
            dimension_semantics=("parallel", "parallel", "arbitrary"),
            vmem_limit_bytes=_vmem_limit_bytes(),
        ),
        cost_estimate=cost,
    )(*args)
    return out[:M, :N]


# ---------------------------------------------------------------------------
# Flash attention kernel: grid (B, N/tq, N/tkv); KV axis is the reduction
# ("arbitrary").  Running max / denom / output accumulator live in f32 VMEM
# scratch.  q already carries the softmax scale (folded into the projection
# weights) and all operands arrive as bf16, so there is no per-step scale or
# pack work.  No full (N, N) score matrix is materialized.
# ---------------------------------------------------------------------------
def _flash_attention_kernel(q_ref, k_ref, v_ref, o_ref, m_ref, l_ref, acc_ref,
                            *, kv_len, block_kv, needs_mask):
    kv_i = pl.program_id(2)

    @pl.when(kv_i == 0)
    def _():
        m_ref[...] = jnp.full(m_ref.shape, -jnp.inf, m_ref.dtype)
        l_ref[...] = jnp.zeros(l_ref.shape, l_ref.dtype)
        acc_ref[...] = jnp.zeros(acc_ref.shape, acc_ref.dtype)

    q = q_ref[0]  # (H, TQ, D)   bf16, pre-scaled
    k = k_ref[0]  # (H, TKV, D)  bf16
    v = v_ref[0]  # (H, TKV, D)  bf16

    # Contract last dims directly -> no k transpose materialized; f32 scores.
    s = jnp.einsum("hqd,hkd->hqk", q, k, preferred_element_type=jnp.float32)

    if needs_mask:  # static: only compiled when the sequence was padded
        kv_pos = kv_i * block_kv + lax.broadcasted_iota(jnp.int32, s.shape, 2)
        s = jnp.where(kv_pos < kv_len, s, -1e30)

    m_prev = m_ref[...]
    m_new = jnp.maximum(m_prev, jnp.max(s, axis=-1, keepdims=True))
    alpha = jnp.exp(m_prev - m_new)
    p = jnp.exp(s - m_new)
    l_ref[...] = alpha * l_ref[...] + jnp.sum(p, axis=-1, keepdims=True)
    acc_ref[...] = alpha * acc_ref[...] + jnp.einsum(
        "hqk,hkd->hqd", p.astype(v.dtype), v, preferred_element_type=jnp.float32
    )
    m_ref[...] = m_new

    @pl.when(kv_i == pl.num_programs(2) - 1)
    def _():
        # Exact 1/l normalization: once per q block, off the hot path.
        o_ref[0] = (acc_ref[...] / l_ref[...]).astype(o_ref.dtype)


def _seq_tile(n, cap):
    if n <= cap:
        return _round_up(n, 8)
    return cap  # cap is a 128-multiple by default


def pallas_flash_attention(q, k, v, *, block_q=256, block_kv=256):
    """q, k, v: (B, H, N, D) bf16 (q pre-scaled) -> (B, H, N, D) bf16."""
    B, H, N, D = q.shape
    tq = _seq_tile(N, block_q)
    tkv = _seq_tile(N, block_kv)
    step = tq * tkv // math.gcd(tq, tkv)
    n_pad = _round_up(N, step)

    needs_mask = n_pad != N
    if needs_mask:
        pad = ((0, 0), (0, 0), (0, n_pad - N), (0, 0))
        q, k, v = (jnp.pad(t, pad) for t in (q, k, v))

    grid = (B, n_pad // tq, n_pad // tkv)

    q_spec = pl.BlockSpec((1, H, tq, D), lambda b, qi, ki: (b, 0, qi, 0))
    kv_spec = pl.BlockSpec((1, H, tkv, D), lambda b, qi, ki: (b, 0, ki, 0))
    o_spec = pl.BlockSpec((1, H, tq, D), lambda b, qi, ki: (b, 0, qi, 0))

    itemsize = jnp.dtype(q.dtype).itemsize
    cost = pl.CostEstimate(
        flops=int(4 * B * H * n_pad * n_pad * D),
        transcendentals=int(B * H * n_pad * n_pad),
        bytes_accessed=int(4 * B * H * n_pad * D * itemsize),
    )

    out = pl.pallas_call(
        functools.partial(_flash_attention_kernel,
                          kv_len=N, block_kv=tkv, needs_mask=needs_mask),
        out_shape=jax.ShapeDtypeStruct((B, H, n_pad, D), q.dtype),
        grid_spec=pltpu.PrefetchScalarGridSpec(
            num_scalar_prefetch=0,
            grid=grid,
            in_specs=[q_spec, kv_spec, kv_spec],
            out_specs=o_spec,
            scratch_shapes=[
                pltpu.VMEM((H, tq, 1), jnp.float32),  # running max  m
                pltpu.VMEM((H, tq, 1), jnp.float32),  # running sum  l
                pltpu.VMEM((H, tq, D), jnp.float32),  # output accumulator
            ],
        ),
        compiler_params=pltpu.CompilerParams(
            dimension_semantics=("parallel", "parallel", "arbitrary"),
            vmem_limit_bytes=_vmem_limit_bytes(),
        ),
        cost_estimate=cost,
    )(q, k, v)
    return out[:, :, :N, :]


# ---------------------------------------------------------------------------
# Full module forward (mask=None path; Dropout(p=0.0) is identity).
# ---------------------------------------------------------------------------
def attention_forward(x, w_qkv, w_out, b_out, heads, *, block_q=256, block_kv=256):
    """x: (b, n, dim). w_qkv: (3*inner, dim). w_out: (dim, inner). b_out: (dim,)."""
    b, n, dim = x.shape
    inner = w_qkv.shape[0] // 3
    dim_head = inner // heads
    scale = float(dim_head) ** -0.5

    # Fold the softmax scale into the Q rows of the QKV weight (one tiny XLA op
    # on the weight) so the flash kernel never rescales q.
    w_q, w_k, w_v = jnp.split(w_qkv, 3, axis=0)
    w_qkv_scaled = jnp.concatenate([w_q * scale, w_k, w_v], axis=0)

    x2 = x.reshape(b * n, dim)
    # to_qkv: Linear(dim, 3*inner, bias=False); bf16 output halves the HBM
    # traffic feeding the attention kernel.
    qkv = pallas_linear(x2, w_qkv_scaled, out_dtype=_COMPUTE_DTYPE)  # (b*n, 3*inner) bf16
    q, k, v = jnp.split(qkv, 3, axis=-1)

    def to_bhnd(t):
        return t.reshape(b, n, heads, dim_head).transpose(0, 2, 1, 3)

    # TODO(synk): fuse this head split/merge transpose into the attention
    # BlockSpecs (needs dim_head-wide lane slicing of the qkv buffer, which the
    # (8,128) block rule disallows for dim_head < 128); running it on bf16
    # already halves the round-trip bytes.
    q, k, v = map(to_bhnd, (q, k, v))                                # (b, h, n, d) bf16

    out = pallas_flash_attention(q, k, v, block_q=block_q, block_kv=block_kv)
    out = out.transpose(0, 2, 1, 3).reshape(b * n, inner)            # (b*n, inner) bf16

    # to_out[0]: Linear(inner, dim) with bias; Dropout(0.0) is identity.
    y = pallas_linear(out, w_out, b_out, out_dtype=x.dtype)          # (b*n, dim)
    return y.reshape(b, n, dim)


# ---------------------------------------------------------------------------
# Pure-JAX reference (exact PyTorch-module semantics in f32, for sanity check).
# ---------------------------------------------------------------------------
def attention_ref(x, w_qkv, w_out, b_out, heads):
    b, n, dim = x.shape
    inner = w_qkv.shape[0] // 3
    dim_head = inner // heads
    scale = float(dim_head) ** -0.5
    qkv = x @ w_qkv.T
    q, k, v = jnp.split(qkv, 3, axis=-1)
    q, k, v = (t.reshape(b, n, heads, dim_head).transpose(0, 2, 1, 3)
               for t in (q, k, v))
    dots = jnp.einsum("bhid,bhjd->bhij", q, k) * scale
    attn = jax.nn.softmax(dots, axis=-1)
    out = jnp.einsum("bhij,bhjd->bhid", attn, v)
    out = out.transpose(0, 2, 1, 3).reshape(b, n, inner)
    return out @ w_out.T + b_out


if __name__ == "__main__":
    # Small shapes consistent with the module.
    batch, seq, dim = 2, 8, 32
    heads, dim_head = 4, 16
    inner = heads * dim_head

    key = jax.random.PRNGKey(0)
    kx, kq, kw, kb = jax.random.split(key, 4)
    x = jax.random.normal(kx, (batch, seq, dim), dtype=jnp.float32)
    w_qkv = jax.random.normal(kq, (inner * 3, dim), dtype=jnp.float32) * 0.05
    w_out = jax.random.normal(kw, (dim, inner), dtype=jnp.float32) * 0.05
    b_out = jax.random.normal(kb, (dim,), dtype=jnp.float32) * 0.05

    fwd = jax.jit(functools.partial(attention_forward, heads=heads))
    y = fwd(x, w_qkv, w_out, b_out)
    y = jax.block_until_ready(y)

    y_ref = attention_ref(x, w_qkv, w_out, b_out, heads)
    assert y.shape == (batch, seq, dim)
    # bf16 streamed activations / MXU operands vs full-f32 reference -> loose tol.
    assert jnp.allclose(y, y_ref, atol=2e-2, rtol=2e-2), "mismatch vs reference"

    print("KERNEL_OK")
</pallas_src>

<mosaic_0001>
module attributes {stable_mosaic.version = 11 : i64} {
  func.func @_matmul_kernel(%arg0: i32, %arg1: i32, %arg2: i32, %arg3: memref<16x32xbf16, #tpu.memory_space<vmem>>, %arg4: memref<192x32xbf16, #tpu.memory_space<vmem>>, %arg5: memref<16x192xbf16, #tpu.memory_space<vmem>>, %arg6: memref<16x192xf32, #tpu.memory_space<vmem>>) attributes {dimension_semantics = [#tpu.dimension_semantics<parallel>, #tpu.dimension_semantics<parallel>, #tpu.dimension_semantics<arbitrary>], iteration_bounds = array<i64: 1, 1, 1>, scalar_prefetch = 0 : i64, scratch_operands = 1 : i64, tpu.core_type = #tpu.core_type<tc>, window_params = [{transform_indices = @transform_0, window_bounds = array<i64: 16, 32>}, {transform_indices = @transform_1, window_bounds = array<i64: 192, 32>}, {transform_indices = @transform_2, window_bounds = array<i64: 16, 192>}]} {
    %c0_i32 = arith.constant 0 : i32
    %0 = arith.cmpi eq, %arg2, %c0_i32 : i32
    %1 = arith.extui %0 : i1 to i32
    %c0_i32_0 = arith.constant 0 : i32
    %2 = arith.cmpi ne, %1, %c0_i32_0 : i32
    scf.if %2 {
      %cst_10 = arith.constant 0.000000e+00 : f32
      %12 = vector.broadcast %cst_10 : f32 to vector<16x192xf32>
      %c0_11 = arith.constant 0 : index
      %c0_12 = arith.constant 0 : index
      %13 = vector.load %arg6[%c0_11, %c0_12] : memref<16x192xf32, #tpu.memory_space<vmem>>, vector<16x192xf32>
      tpu.vector_store %arg6[%c0_11, %c0_12], %12 {strides = array<i32>} : memref<16x192xf32, #tpu.memory_space<vmem>>, vector<16x192xf32>,
    } else {
    }
    %c0 = arith.constant 0 : index
    %c0_1 = arith.constant 0 : index
    %3 = vector.load %arg6[%c0, %c0_1] : memref<16x192xf32, #tpu.memory_space<vmem>>, vector<16x192xf32>
    %c0_2 = arith.constant 0 : index
    %c0_3 = arith.constant 0 : index
    %4 = vector.load %arg3[%c0_2, %c0_3] : memref<16x32xbf16, #tpu.memory_space<vmem>>, vector<16x32xbf16>
    %c0_4 = arith.constant 0 : index
    %c0_5 = arith.constant 0 : index
    %5 = vector.load %arg4[%c0_4, %c0_5] : memref<192x32xbf16, #tpu.memory_space<vmem>>, vector<192x32xbf16>
    %cst = arith.constant dense<0.000000e+00> : vector<16x192xf32>
    %6 = tpu.matmul %4, %5, %cst {dimension_numbers = #tpu.dot_dimension_numbers<[1], [1], [0], [0], [0, 0, 1, 0], [], []>} : vector<16x32xbf16>, vector<192x32xbf16>, vector<16x192xf32> -> vector<16x192xf32>
    %7 = arith.addf %3, %6 : vector<16x192xf32>
    %c0_6 = arith.constant 0 : index
    %c0_7 = arith.constant 0 : index
    %8 = vector.load %arg6[%c0_6, %c0_7] : memref<16x192xf32, #tpu.memory_space<vmem>>, vector<16x192xf32>
    tpu.vector_store %arg6[%c0_6, %c0_7], %7 {strides = array<i32>} : memref<16x192xf32, #tpu.memory_space<vmem>>, vector<16x192xf32>,
    %c0_i32_8 = arith.constant 0 : i32
    %9 = arith.cmpi eq, %arg2, %c0_i32_8 : i32
    %10 = arith.extui %9 : i1 to i32
    %c0_i32_9 = arith.constant 0 : i32
    %11 = arith.cmpi ne, %10, %c0_i32_9 : i32
    scf.if %11 {
      %c0_10 = arith.constant 0 : index
      %c0_11 = arith.constant 0 : index
      %12 = vector.load %arg6[%c0_10, %c0_11] : memref<16x192xf32, #tpu.memory_space<vmem>>, vector<16x192xf32>
      %13 = arith.truncf %12 : vector<16x192xf32> to vector<16x192xbf16>
      %c0_12 = arith.constant 0 : index
      %c0_13 = arith.constant 0 : index
      %14 = vector.load %arg5[%c0_12, %c0_13] : memref<16x192xbf16, #tpu.memory_space<vmem>>, vector<16x192xbf16>
      tpu.vector_store %arg5[%c0_12, %c0_13], %13 {strides = array<i32>} : memref<16x192xbf16, #tpu.memory_space<vmem>>, vector<16x192xbf16>,
    } else {
    }
    return
  }
  func.func @transform_0(%arg0: i32, %arg1: i32, %arg2: i32) -> (i32, i32) {
    %c0_i32 = arith.constant 0 : i32
    return %arg0, %arg2 : i32, i32
  }
  func.func @transform_1(%arg0: i32, %arg1: i32, %arg2: i32) -> (i32, i32) {
    %c0_i32 = arith.constant 0 : i32
    return %arg1, %arg2 : i32, i32
  }
  func.func @transform_2(%arg0: i32, %arg1: i32, %arg2: i32) -> (i32, i32) {
    %c0_i32 = arith.constant 0 : i32
    return %arg0, %arg1 : i32, i32
  }
}

module attributes {stable_mosaic.version = 11 : i64} {
  func.func @_flash_attention_kernel(%arg0: i32, %arg1: i32, %arg2: i32, %arg3: memref<1x4x8x16xbf16, #tpu.memory_space<vmem>>, %arg4: memref<1x4x8x16xbf16, #tpu.memory_space<vmem>>, %arg5: memref<1x4x8x16xbf16, #tpu.memory_space<vmem>>, %arg6: memref<1x4x8x16xbf16, #tpu.memory_space<vmem>>, %arg7: memref<4x8x1xf32, #tpu.memory_space<vmem>>, %arg8: memref<4x8x1xf32, #tpu.memory_space<vmem>>, %arg9: memref<4x8x16xf32, #tpu.memory_space<vmem>>) attributes {dimension_semantics = [#tpu.dimension_semantics<parallel>, #tpu.dimension_semantics<parallel>, #tpu.dimension_semantics<arbitrary>], iteration_bounds = array<i64: 2, 1, 1>, scalar_prefetch = 0 : i64, scratch_operands = 3 : i64, tpu.core_type = #tpu.core_type<tc>, window_params = [{transform_indices = @transform_0, window_bounds = array<i64: 1, 4, 8, 16>}, {transform_indices = @transform_1, window_bounds = array<i64: 1, 4, 8, 16>}, {transform_indices = @transform_2, window_bounds = array<i64: 1, 4, 8, 16>}, {transform_indices = @transform_3, window_bounds = array<i64: 1, 4, 8, 16>}]} {
    %c0_i32 = arith.constant 0 : i32
    %0 = arith.cmpi eq, %arg2, %c0_i32 : i32
    %1 = arith.extui %0 : i1 to i32
    %c0_i32_0 = arith.constant 0 : i32
    %2 = arith.cmpi ne, %1, %c0_i32_0 : i32
    scf.if %2 {
      %cst_35 = arith.constant 0xFF800000 : f32
      %36 = vector.broadcast %cst_35 : f32 to vector<4x8x1xf32>
      %c0_36 = arith.constant 0 : index
      %c0_37 = arith.constant 0 : index
      %c0_38 = arith.constant 0 : index
      %37 = vector.load %arg7[%c0_36, %c0_37, %c0_38] : memref<4x8x1xf32, #tpu.memory_space<vmem>>, vector<4x8x1xf32>
      tpu.vector_store %arg7[%c0_36, %c0_37, %c0_38], %36 {strides = array<i32>} : memref<4x8x1xf32, #tpu.memory_space<vmem>>, vector<4x8x1xf32>,
      %cst_39 = arith.constant 0.000000e+00 : f32
      %38 = vector.broadcast %cst_39 : f32 to vector<4x8x1xf32>
      %c0_40 = arith.constant 0 : index
      %c0_41 = arith.constant 0 : index
      %c0_42 = arith.constant 0 : index
      %39 = vector.load %arg8[%c0_40, %c0_41, %c0_42] : memref<4x8x1xf32, #tpu.memory_space<vmem>>, vector<4x8x1xf32>
      tpu.vector_store %arg8[%c0_40, %c0_41, %c0_42], %38 {strides = array<i32>} : memref<4x8x1xf32, #tpu.memory_space<vmem>>, vector<4x8x1xf32>,
      %cst_43 = arith.constant 0.000000e+00 : f32
      %40 = vector.broadcast %cst_43 : f32 to vector<4x8x16xf32>
      %c0_44 = arith.constant 0 : index
      %c0_45 = arith.constant 0 : index
      %c0_46 = arith.constant 0 : index
      %41 = vector.load %arg9[%c0_44, %c0_45, %c0_46] : memref<4x8x16xf32, #tpu.memory_space<vmem>>, vector<4x8x16xf32>
      tpu.vector_store %arg9[%c0_44, %c0_45, %c0_46], %40 {strides = array<i32>} : memref<4x8x16xf32, #tpu.memory_space<vmem>>, vector<4x8x16xf32>,
    } else {
    }
    %c0 = arith.constant 0 : index
    %c0_1 = arith.constant 0 : index
    %c0_2 = arith.constant 0 : index
    %c0_3 = arith.constant 0 : index
    %3 = vector.load %arg3[%c0, %c0_1, %c0_2, %c0_3] : memref<1x4x8x16xbf16, #tpu.memory_space<vmem>>, vector<1x4x8x16xbf16>
    %4 = vector.shape_cast %3 : vector<1x4x8x16xbf16> to vector<4x8x16xbf16>
    %c0_4 = arith.constant 0 : index
    %c0_5 = arith.constant 0 : index
    %c0_6 = arith.constant 0 : index
    %c0_7 = arith.constant 0 : index
    %5 = vector.load %arg4[%c0_4, %c0_5, %c0_6, %c0_7] : memref<1x4x8x16xbf16, #tpu.memory_space<vmem>>, vector<1x4x8x16xbf16>
    %6 = vector.shape_cast %5 : vector<1x4x8x16xbf16> to vector<4x8x16xbf16>
    %c0_8 = arith.constant 0 : index
    %c0_9 = arith.constant 0 : index
    %c0_10 = arith.constant 0 : index
    %c0_11 = arith.constant 0 : index
    %7 = vector.load %arg5[%c0_8, %c0_9, %c0_10, %c0_11] : memref<1x4x8x16xbf16, #tpu.memory_space<vmem>>, vector<1x4x8x16xbf16>
    %8 = vector.shape_cast %7 : vector<1x4x8x16xbf16> to vector<4x8x16xbf16>
    "tpu.trace_start"() <{level = 10 : i32, message = "hqd,hkd->hqk"}> : () -> ()
    %cst = arith.constant dense<0.000000e+00> : vector<4x8x8xf32>
    %9 = tpu.matmul %4, %6, %cst {dimension_numbers = #tpu.dot_dimension_numbers<[2], [2], [1], [1], [0, 0, 0, 1, 1, 1], [0], [0]>} : vector<4x8x16xbf16>, vector<4x8x16xbf16>, vector<4x8x8xf32> -> vector<4x8x8xf32>
    "tpu.trace_stop"() : () -> ()
    %c0_12 = arith.constant 0 : index
    %c0_13 = arith.constant 0 : index
    %c0_14 = arith.constant 0 : index
    %10 = vector.load %arg7[%c0_12, %c0_13, %c0_14] : memref<4x8x1xf32, #tpu.memory_space<vmem>>, vector<4x8x1xf32>
    %cst_15 = arith.constant dense<0xFF800000> : vector<4x8xf32>
    %11 = vector.multi_reduction <maximumf>, %9, %cst_15 [2] : vector<4x8x8xf32> to vector<4x8xf32>
    %12 = vector.shape_cast %11 : vector<4x8xf32> to vector<4x8x1xf32>
    %13 = arith.maximumf %10, %12 : vector<4x8x1xf32>
    %14 = arith.subf %10, %13 : vector<4x8x1xf32>
    %15 = math.exp %14 : vector<4x8x1xf32>
    %16 = vector.broadcast %13 : vector<4x8x1xf32> to vector<4x8x8xf32>
    %17 = arith.subf %9, %16 : vector<4x8x8xf32>
    %18 = math.exp %17 : vector<4x8x8xf32>
    %c0_16 = arith.constant 0 : index
    %c0_17 = arith.constant 0 : index
    %c0_18 = arith.constant 0 : index
    %19 = vector.load %arg8[%c0_16, %c0_17, %c0_18] : memref<4x8x1xf32, #tpu.memory_space<vmem>>, vector<4x8x1xf32>
    %20 = arith.mulf %15, %19 : vector<4x8x1xf32>
    %cst_19 = arith.constant dense<0.000000e+00> : vector<4x8xf32>
    %21 = vector.multi_reduction <add>, %18, %cst_19 [2] : vector<4x8x8xf32> to vector<4x8xf32>
    %22 = vector.shape_cast %21 : vector<4x8xf32> to vector<4x8x1xf32>
    %23 = arith.addf %20, %22 : vector<4x8x1xf32>
    %c0_20 = arith.constant 0 : index
    %c0_21 = arith.constant 0 : index
    %c0_22 = arith.constant 0 : index
    %24 = vector.load %arg8[%c0_20, %c0_21, %c0_22] : memref<4x8x1xf32, #tpu.memory_space<vmem>>, vector<4x8x1xf32>
    tpu.vector_store %arg8[%c0_20, %c0_21, %c0_22], %23 {strides = array<i32>} : memref<4x8x1xf32, #tpu.memory_space<vmem>>, vector<4x8x1xf32>,
    %c0_23 = arith.constant 0 : index
    %c0_24 = arith.constant 0 : index
    %c0_25 = arith.constant 0 : index
    %25 = vector.load %arg9[%c0_23, %c0_24, %c0_25] : memref<4x8x16xf32, #tpu.memory_space<vmem>>, vector<4x8x16xf32>
    %26 = vector.broadcast %15 : vector<4x8x1xf32> to vector<4x8x16xf32>
    %27 = arith.mulf %26, %25 : vector<4x8x16xf32>
    %28 = arith.truncf %18 : vector<4x8x8xf32> to vector<4x8x8xbf16>
    "tpu.trace_start"() <{level = 10 : i32, message = "hqk,hkd->hqd"}> : () -> ()
    %cst_26 = arith.constant dense<0.000000e+00> : vector<4x8x16xf32>
    %29 = tpu.matmul %28, %8, %cst_26 {dimension_numbers = #tpu.dot_dimension_numbers<[2], [1], [1], [2], [0, 0, 0, 1, 1, 2], [0], [0]>} : vector<4x8x8xbf16>, vector<4x8x16xbf16>, vector<4x8x16xf32> -> vector<4x8x16xf32>
    "tpu.trace_stop"() : () -> ()
    %30 = arith.addf %27, %29 : vector<4x8x16xf32>
    %c0_27 = arith.constant 0 : index
    %c0_28 = arith.constant 0 : index
    %c0_29 = arith.constant 0 : index
    %31 = vector.load %arg9[%c0_27, %c0_28, %c0_29] : memref<4x8x16xf32, #tpu.memory_space<vmem>>, vector<4x8x16xf32>
    tpu.vector_store %arg9[%c0_27, %c0_28, %c0_29], %30 {strides = array<i32>} : memref<4x8x16xf32, #tpu.memory_space<vmem>>, vector<4x8x16xf32>,
    %c0_30 = arith.constant 0 : index
    %c0_31 = arith.constant 0 : index
    %c0_32 = arith.constant 0 : index
    %32 = vector.load %arg7[%c0_30, %c0_31, %c0_32] : memref<4x8x1xf32, #tpu.memory_space<vmem>>, vector<4x8x1xf32>
    tpu.vector_store %arg7[%c0_30, %c0_31, %c0_32], %13 {strides = array<i32>} : memref<4x8x1xf32, #tpu.memory_space<vmem>>, vector<4x8x1xf32>,
    %c0_i32_33 = arith.constant 0 : i32
    %33 = arith.cmpi eq, %arg2, %c0_i32_33 : i32
    %34 = arith.extui %33 : i1 to i32
    %c0_i32_34 = arith.constant 0 : i32
    %35 = arith.cmpi ne, %34, %c0_i32_34 : i32
    scf.if %35 {
      %c0_35 = arith.constant 0 : index
      %c0_36 = arith.constant 0 : index
      %c0_37 = arith.constant 0 : index
      %36 = vector.load %arg9[%c0_35, %c0_36, %c0_37] : memref<4x8x16xf32, #tpu.memory_space<vmem>>, vector<4x8x16xf32>
      %c0_38 = arith.constant 0 : index
      %c0_39 = arith.constant 0 : index
      %c0_40 = arith.constant 0 : index
      %37 = vector.load %arg8[%c0_38, %c0_39, %c0_40] : memref<4x8x1xf32, #tpu.memory_space<vmem>>, vector<4x8x1xf32>
      %38 = vector.broadcast %37 : vector<4x8x1xf32> to vector<4x8x16xf32>
      %39 = arith.divf %36, %38 : vector<4x8x16xf32>
      %40 = arith.truncf %39 : vector<4x8x16xf32> to vector<4x8x16xbf16>
      %c0_41 = arith.constant 0 : index
      %c0_42 = arith.constant 0 : index
      %c0_43 = arith.constant 0 : index
      %c0_44 = arith.constant 0 : index
      %41 = vector.load %arg6[%c0_41, %c0_42, %c0_43, %c0_44] : memref<1x4x8x16xbf16, #tpu.memory_space<vmem>>, vector<1x4x8x16xbf16>
      %42 = vector.shape_cast %41 : vector<1x4x8x16xbf16> to vector<4x8x16xbf16>
      %43 = vector.shape_cast %40 : vector<4x8x16xbf16> to vector<1x4x8x16xbf16>
      tpu.vector_store %arg6[%c0_41, %c0_42, %c0_43, %c0_44], %43 {strides = array<i32>} : memref<1x4x8x16xbf16, #tpu.memory_space<vmem>>, vector<1x4x8x16xbf16>,
    } else {
    }
    return
  }
  func.func @transform_0(%arg0: i32, %arg1: i32, %arg2: i32) -> (i32, i32, i32, i32) {
    %c0_i32 = arith.constant 0 : i32
    %c0_i32_0 = arith.constant 0 : i32
    %c0_i32_1 = arith.constant 0 : i32
    return %arg0, %c0_i32, %arg1, %c0_i32_0 : i32, i32, i32, i32
  }
  func.func @transform_1(%arg0: i32, %arg1: i32, %arg2: i32) -> (i32, i32, i32, i32) {
    %c0_i32 = arith.constant 0 : i32
    %c0_i32_0 = arith.constant 0 : i32
    %c0_i32_1 = arith.constant 0 : i32
    return %arg0, %c0_i32, %arg2, %c0_i32_0 : i32, i32, i32, i32
  }
  func.func @transform_2(%arg0: i32, %arg1: i32, %arg2: i32) -> (i32, i32, i32, i32) {
    %c0_i32 = arith.constant 0 : i32
    %c0_i32_0 = arith.constant 0 : i32
    %c0_i32_1 = arith.constant 0 : i32
    return %arg0, %c0_i32, %arg2, %c0_i32_0 : i32, i32, i32, i32
  }
  func.func @transform_3(%arg0: i32, %arg1: i32, %arg2: i32) -> (i32, i32, i32, i32) {
    %c0_i32 = arith.constant 0 : i32
    %c0_i32_0 = arith.constant 0 : i32
    %c0_i32_1 = arith.constant 0 : i32
    return %arg0, %c0_i32, %arg1, %c0_i32_0 : i32, i32, i32, i32
  }
}

module attributes {stable_mosaic.version = 11 : i64} {
  func.func @_matmul_bias_kernel(%arg0: i32, %arg1: i32, %arg2: i32, %arg3: memref<16x64xbf16, #tpu.memory_space<vmem>>, %arg4: memref<32x64xbf16, #tpu.memory_space<vmem>>, %arg5: memref<1x32xf32, #tpu.memory_space<vmem>>, %arg6: memref<16x32xf32, #tpu.memory_space<vmem>>, %arg7: memref<16x32xf32, #tpu.memory_space<vmem>>) attributes {dimension_semantics = [#tpu.dimension_semantics<parallel>, #tpu.dimension_semantics<parallel>, #tpu.dimension_semantics<arbitrary>], iteration_bounds = array<i64: 1, 1, 1>, scalar_prefetch = 0 : i64, scratch_operands = 1 : i64, tpu.core_type = #tpu.core_type<tc>, window_params = [{transform_indices = @transform_0, window_bounds = array<i64: 16, 64>}, {transform_indices = @transform_1, window_bounds = array<i64: 32, 64>}, {transform_indices = @transform_2, window_bounds = array<i64: 1, 32>}, {transform_indices = @transform_3, window_bounds = array<i64: 16, 32>}]} {
    %c0_i32 = arith.constant 0 : i32
    %0 = arith.cmpi eq, %arg2, %c0_i32 : i32
    %1 = arith.extui %0 : i1 to i32
    %c0_i32_0 = arith.constant 0 : i32
    %2 = arith.cmpi ne, %1, %c0_i32_0 : i32
    scf.if %2 {
      %cst_10 = arith.constant 0.000000e+00 : f32
      %12 = vector.broadcast %cst_10 : f32 to vector<16x32xf32>
      %c0_11 = arith.constant 0 : index
      %c0_12 = arith.constant 0 : index
      %13 = vector.load %arg7[%c0_11, %c0_12] : memref<16x32xf32, #tpu.memory_space<vmem>>, vector<16x32xf32>
      tpu.vector_store %arg7[%c0_11, %c0_12], %12 {strides = array<i32>} : memref<16x32xf32, #tpu.memory_space<vmem>>, vector<16x32xf32>,
    } else {
    }
    %c0 = arith.constant 0 : index
    %c0_1 = arith.constant 0 : index
    %3 = vector.load %arg7[%c0, %c0_1] : memref<16x32xf32, #tpu.memory_space<vmem>>, vector<16x32xf32>
    %c0_2 = arith.constant 0 : index
    %c0_3 = arith.constant 0 : index
    %4 = vector.load %arg3[%c0_2, %c0_3] : memref<16x64xbf16, #tpu.memory_space<vmem>>, vector<16x64xbf16>
    %c0_4 = arith.constant 0 : index
    %c0_5 = arith.constant 0 : index
    %5 = vector.load %arg4[%c0_4, %c0_5] : memref<32x64xbf16, #tpu.memory_space<vmem>>, vector<32x64xbf16>
    %cst = arith.constant dense<0.000000e+00> : vector<16x32xf32>
    %6 = tpu.matmul %4, %5, %cst {dimension_numbers = #tpu.dot_dimension_numbers<[1], [1], [0], [0], [0, 0, 1, 0], [], []>} : vector<16x64xbf16>, vector<32x64xbf16>, vector<16x32xf32> -> vector<16x32xf32>
    %7 = arith.addf %3, %6 : vector<16x32xf32>
    %c0_6 = arith.constant 0 : index
    %c0_7 = arith.constant 0 : index
    %8 = vector.load %arg7[%c0_6, %c0_7] : memref<16x32xf32, #tpu.memory_space<vmem>>, vector<16x32xf32>
    tpu.vector_store %arg7[%c0_6, %c0_7], %7 {strides = array<i32>} : memref<16x32xf32, #tpu.memory_space<vmem>>, vector<16x32xf32>,
    %c0_i32_8 = arith.constant 0 : i32
    %9 = arith.cmpi eq, %arg2, %c0_i32_8 : i32
    %10 = arith.extui %9 : i1 to i32
    %c0_i32_9 = arith.constant 0 : i32
    %11 = arith.cmpi ne, %10, %c0_i32_9 : i32
    scf.if %11 {
      %c0_10 = arith.constant 0 : index
      %c0_11 = arith.constant 0 : index
      %12 = vector.load %arg7[%c0_10, %c0_11] : memref<16x32xf32, #tpu.memory_space<vmem>>, vector<16x32xf32>
      %c0_12 = arith.constant 0 : index
      %c0_13 = arith.constant 0 : index
      %13 = vector.load %arg5[%c0_12, %c0_13] : memref<1x32xf32, #tpu.memory_space<vmem>>, vector<1x32xf32>
      %14 = vector.broadcast %13 : vector<1x32xf32> to vector<16x32xf32>
      %15 = arith.addf %12, %14 : vector<16x32xf32>
      %c0_14 = arith.constant 0 : index
      %c0_15 = arith.constant 0 : index
      %16 = vector.load %arg6[%c0_14, %c0_15] : memref<16x32xf32, #tpu.memory_space<vmem>>, vector<16x32xf32>
      tpu.vector_store %arg6[%c0_14, %c0_15], %15 {strides = array<i32>} : memref<16x32xf32, #tpu.memory_space<vmem>>, vector<16x32xf32>,
    } else {
    }
    return
  }
  func.func @transform_0(%arg0: i32, %arg1: i32, %arg2: i32) -> (i32, i32) {
    %c0_i32 = arith.constant 0 : i32
    return %arg0, %arg2 : i32, i32
  }
  func.func @transform_1(%arg0: i32, %arg1: i32, %arg2: i32) -> (i32, i32) {
    %c0_i32 = arith.constant 0 : i32
    return %arg1, %arg2 : i32, i32
  }
  func.func @transform_2(%arg0: i32, %arg1: i32, %arg2: i32) -> (i32, i32) {
    %c0_i32 = arith.constant 0 : i32
    %c0_i32_0 = arith.constant 0 : i32
    return %c0_i32, %arg1 : i32, i32
  }
  func.func @transform_3(%arg0: i32, %arg1: i32, %arg2: i32) -> (i32, i32) {
    %c0_i32 = arith.constant 0 : i32
    return %arg0, %arg1 : i32, i32
  }
}

</mosaic_0001>

<llo_original>
// kernel: attention_forward.5
$region0: #{attention_forward.5}
  #allocation0 [shape = 'u32[]', space=smem, size = 0x4, offset = 0x4, fixed_abs, tag = 'smem constant byte address 0x4 - core index']
  #allocation1 [shape = 'u32[144,128]{1,0:T(1,128)}', space=vmem, size = 0x12000, scoped, tag = 'internal scratch']
  #allocation2 [shape = 'f32[16,32]{1,0:T(8,128)}', space=vmem, size = 0x2000, scoped, tag = 'scratch operand']
  %s0 = inlined_call_operand.vmem [shape: bf16[16,64], index: 0, kind: input, shape index: {}]
  %s1 = inlined_call_operand.vmem [shape: bf16[32,64], index: 1, kind: input, shape index: {}]
  %s2 = inlined_call_operand.vmem [shape: f32[1,32], index: 2, kind: input, shape index: {}]
  %s3 = inlined_call_operand.hbm [shape: f32[16,32], index: 3, kind: output, shape index: {}]
  %s4 = sld [smem:[#allocation0]]
  $region30: #{attention_forward.5} parent=0
    _
  %s6 = ssub.s32 1, %s4
  %s7 = scalar_select 0, %s6, %s4
  $region1: #{attention_forward.5} parent=0
    #allocation3 [shape = 'u8[8192]{0}', space=vmem, size = 0x2000, scoped, tag = 'output window, operand 0, single buffered']
    #allocation4 [shape = 's32[1]{0}', space=sflag, size = 0x4, scoped, tag = 'scoped memory for attention_forward.5']
    %8 = vsyncpa [#allocation4], 0
    // Predicated region
    $region2: #{attention_forward.5} parent=1 // pred_check
      _
    $region3: #{attention_forward.5} parent=1 // pred_check_branch
      %10 = sbr.rel (0) target = $region5
    $region4: #{attention_forward.5} parent=1 // pred_region
      _
    $region5: #{attention_forward.5} parent=1 // pred_fallthru
      _
    // Predicated region
    $region6: #{attention_forward.5} parent=1 // pred_check
      _
    $region7: #{attention_forward.5} parent=1 // pred_check_branch
      %12 = sbr.rel (0) target = $region9
    $region8: #{attention_forward.5} parent=1 // pred_region
      _
    $region9: #{attention_forward.5} parent=1 // pred_fallthru
      _
    // Predicated region
    $region10: #{attention_forward.5} parent=1 // pred_check
      _
    $region11: #{attention_forward.5} parent=1 // pred_check_branch
      %14 = sbr.rel (0) target = $region13
    $region12: #{attention_forward.5} parent=1 // pred_region
      _
    $region13: #{attention_forward.5} parent=1 // pred_fallthru
      _
    %p16 = scmp.eq.s32.totalorder 0, 0
    // Predicated region
    $region14: #{attention_forward.5} parent=1 // pred_check
      %p17 = pneg %p16
    $region15: #{attention_forward.5} parent=1 // pred_check_branch
      %19 = sbr.rel (%p17) target = $region17
    $region16: #{attention_forward.5} parent=1 // pred_region
      %vm20 = vcmask 261120
      %21 = vst.msk [vmem:[#allocation2] sm:$0xff] %vm20, 0.0
      %22 = vst.msk [vmem:[#allocation2 + $0x8] sm:$0xff] %vm20, 0.0
    $region17: #{attention_forward.5} parent=1 // pred_fallthru
      _
    %v23 = vld [vmem:[#allocation2] sm:$0xff]
    %v24 = vld [vmem:[#allocation2 + $0x8] sm:$0xff]
    %v25 = vld [vmem:[%s0] sm:$0xf]
    %v26 = vld [vmem:[%s0 + $0x4] sm:$0xf]
    %v27 = vld [vmem:[%s1] sm:$0xf]
    %v28 = vld [vmem:[%s1 + $0x4] sm:$0xf]
    %v29 = vld [vmem:[%s1 + $0x8] sm:$0xf]
    %v30 = vld [vmem:[%s1 + $0xc] sm:$0xf]
    %v33 = vunpack.c.l.b16 %v25
    %v34 = vunpack.c.l.b16 %v26
    %v35 = vpack.c.b16 %v34, %v33
    %v40 = vunpack.c.l.b16 %v27
    %v41 = vunpack.c.l.b16 %v28
    %v42 = vunpack.c.l.b16 %v29
    %v43 = vunpack.c.l.b16 %v30
    %v44 = vpack.c.b16 %v41, %v40
    %v45 = vpack.c.b16 %v43, %v42
    %vm46 = vcmask 523264
    %v48 = vsel %vm46, %v35, 0
    %v51 = vsel %vm46, %v44, 0
    %v54 = vsel %vm46, %v45, 0
    %56 = vmatprep.subr.bf16.mxu0 0
    %57 = vmatpush1.bf16.xpose.msra.mxu0 %v51
    %58 = vmatprep.subr.bf16.mxu0 0
    %59 = vmatpush1.bf16.xpose.msra.mxu0 %v54
    %60 = vmatprep.subr.bf16.mxu0 0
    %61 = vmatpush1.bf16.xpose.msra.mxu0 0
    %62 = vmatprep.subr.bf16.mxu0 0
    %63 = vmatpush1.bf16.xpose.msra.mxu0 0
    %64 = vmatprep.subr.bf16.mxu0 0
    %65 = vmatpush1.bf16.xpose.msra.mxu0 0
    %66 = vmatprep.subr.bf16.mxu0 0
    %67 = vmatpush1.bf16.xpose.msra.mxu0 0
    %68 = vmatprep.subr.bf16.mxu0 0
    %69 = vmatpush1.bf16.xpose.msra.mxu0 0
    %70 = vmatprep.subr.bf16.mxu0 0
    %71 = vmatpush1.bf16.xpose.msra.mxu0 0
    %72 = vmatprep.subr.bf16.mxu0 0
    %73 = vmatpush1.bf16.xpose.msra.mxu0 0
    %74 = vmatprep.subr.bf16.mxu0 0
    %75 = vmatpush1.bf16.xpose.msra.mxu0 0
    %76 = vmatprep.subr.bf16.mxu0 0
    %77 = vmatpush1.bf16.xpose.msra.mxu0 0
    %78 = vmatprep.subr.bf16.mxu0 0
    %79 = vmatpush1.bf16.xpose.msra.mxu0 0
    %80 = vmatprep.subr.bf16.mxu0 0
    %81 = vmatpush1.bf16.xpose.msra.mxu0 0
    %82 = vmatprep.subr.bf16.mxu0 0
    %83 = vmatpush1.bf16.xpose.msra.mxu0 0
    %84 = vmatprep.subr.bf16.mxu0 0
    %85 = vmatpush1.bf16.xpose.msra.mxu0 0
    %86 = vmatprep.subr.bf16.mxu0 0
    %87 = vmatpush1.bf16.xpose.msra.mxu0 0
    %88 = vmatprep.mubr.bf16.mxu0 0
    %89 = vmatmul.mubr.bf16.gmra.mrb[0].mxu0 %v48
    %v90 = vpop.f32.mrb[0].mxu0
    %v91 = vadd.f32 0.0, %v90
    %v92 = vpop.f32.mrb[0].mxu0
    %v93 = vpop.f32.mrb[0].mxu0
    %v94 = vadd.f32 0.0, %v93
    %v95 = vpop.f32.mrb[0].mxu0
    %96 = vdwg.mxu0
    %v97 = vadd.f32 %v23, %v91
    %v98 = vadd.f32 %v24, %v94
    %vm99 = vcmask 261120
    %100 = vst.msk [vmem:[#allocation2] sm:$0xff] %vm99, %v97
    %101 = vst.msk [vmem:[#allocation2 + $0x8] sm:$0xff] %vm99, %v98
    // Predicated region
    $region18: #{attention_forward.5} parent=1 // pred_check
      %p102 = pneg %p16
    $region19: #{attention_forward.5} parent=1 // pred_check_branch
      %104 = sbr.rel (%p102) target = $region21
    $region20: #{attention_forward.5} parent=1 // pred_region
      %v105 = vld [vmem:[#allocation2] sm:$0xff]
      %v106 = vld [vmem:[#allocation2 + $0x8] sm:$0xff]
      %v107 = vld [vmem:[%s2] sm:$0x1]
      %v109 = vlaneseq
      %v110 = vshrl.u32 %v109, 7
      %v111 = vsub.s32 0, %v110
      %v112 = vrot.slane %v107, %v111
      %v114 = vadd.f32 %v105, %v112
      %v115 = vadd.f32 %v106, %v112
      %116 = vst.msk [vmem:[#allocation3] sm:$0xff] %vm99, %v114
      %117 = vst.msk [vmem:[#allocation3 + $0x8] sm:$0xff] %vm99, %v115
    $region21: #{attention_forward.5} parent=1 // pred_fallthru
      _
    // Predicated region
    $region22: #{attention_forward.5} parent=1 // pred_check
      _
    $region23: #{attention_forward.5} parent=1 // pred_check_branch
      %119 = sbr.rel (0) target = $region25
    $region24: #{attention_forward.5} parent=1 // pred_region
      %s121 = ssub.s32 256, 256
      %122 = vsyncadd [#allocation4], %s121
      %s123 = sshll.u32 [#allocation3], 4
      %s124 = int_to_ptr.vmem [resolvable:$true] %s123
      %129 = dma.vmem_to_hbm [thread:$0]  %s124, 256, %s3, [#allocation4], 128, 128, 8
    $region25: #{attention_forward.5} parent=1 // pred_fallthru
      _
    // Predicated region
    $region26: #{attention_forward.5} parent=1 // pred_check
      _
    $region27: #{attention_forward.5} parent=1 // pred_check_branch
      %131 = sbr.rel (0) target = $region29
    $region28: #{attention_forward.5} parent=1 // pred_region
      %132 = dma.done [#allocation4], 256
    $region29: #{attention_forward.5} parent=1 // pred_fallthru
      _
    %133 = vsyncpa [#allocation4], 1

// kernel: attention_forward.3
$region0: #{attention_forward.3}
  #allocation0 [shape = 'u32[]', space=smem, size = 0x4, offset = 0x4, fixed_abs, tag = 'smem constant byte address 0x4 - core index']
  #allocation1 [shape = 'u32[144,128]{1,0:T(1,128)}', space=vmem, size = 0x12000, scoped, tag = 'internal scratch']
  #allocation2 [shape = 'f32[16,192]{1,0:T(8,128)}', space=vmem, size = 0x4000, scoped, tag = 'scratch operand']
  %s0 = inlined_call_operand.vmem [shape: bf16[16,32], index: 0, kind: input, shape index: {}]
  %s1 = inlined_call_operand.vmem [shape: bf16[192,32], index: 1, kind: input, shape index: {}]
  %s2 = inlined_call_operand.vmem [shape: bf16[16,192], index: 2, kind: output, shape index: {}]
  %s3 = sld [smem:[#allocation0]]
  $region26: #{attention_forward.3} parent=0
    _
  %s5 = ssub.s32 1, %s3
  %s6 = scalar_select 0, %s5, %s3
  // Predicated region
  $region2: #{attention_forward.3} parent=0 // pred_check
    _
  $region3: #{attention_forward.3} parent=0 // pred_check_branch
    %8 = sbr.rel (0) target = $region5
  $region4: #{attention_forward.3} parent=0 // pred_region
    _
  $region5: #{attention_forward.3} parent=0 // pred_fallthru
    _
  // Predicated region
  $region6: #{attention_forward.3} parent=0 // pred_check
    _
  $region7: #{attention_forward.3} parent=0 // pred_check_branch
    %10 = sbr.rel (0) target = $region9
  $region8: #{attention_forward.3} parent=0 // pred_region
    _
  $region9: #{attention_forward.3} parent=0 // pred_fallthru
    _
  %p12 = scmp.eq.s32.totalorder 0, 0
  // Predicated region
  $region10: #{attention_forward.3} parent=0 // pred_check
    %p13 = pneg %p12
  $region11: #{attention_forward.3} parent=0 // pred_check_branch
    %15 = sbr.rel (%p13) target = $region13
  $region12: #{attention_forward.3} parent=0 // pred_region
    %16 = vst [vmem:[#allocation2] sm:$0xff] 0.0
    %vm17 = vcmask 523264
    %18 = vst.msk [vmem:[#allocation2 + $0x8] sm:$0xff] %vm17, 0.0
    %19 = vst [vmem:[#allocation2 + $0x10] sm:$0xff] 0.0
    %20 = vst.msk [vmem:[#allocation2 + $0x18] sm:$0xff] %vm17, 0.0
  $region13: #{attention_forward.3} parent=0 // pred_fallthru
    _
  %v21 = vld [vmem:[#allocation2] sm:$0xff]
  %v22 = vld [vmem:[#allocation2 + $0x8] sm:$0xff]
  %v23 = vld [vmem:[#allocation2 + $0x10] sm:$0xff]
  %v24 = vld [vmem:[#allocation2 + $0x18] sm:$0xff]
  %v25 = vld [vmem:[%s0] sm:$0xf]
  %v26 = vld [vmem:[%s0 + $0x4] sm:$0xf]
  %v27 = vld [vmem:[%s1] sm:$0xf]
  %v28 = vld [vmem:[%s1 + $0x4] sm:$0xf]
  %v29 = vld [vmem:[%s1 + $0x8] sm:$0xf]
  %v30 = vld [vmem:[%s1 + $0xc] sm:$0xf]
  %v31 = vld [vmem:[%s1 + $0x10] sm:$0xf]
  %v32 = vld [vmem:[%s1 + $0x14] sm:$0xf]
  %v33 = vld [vmem:[%s1 + $0x18] sm:$0xf]
  %v34 = vld [vmem:[%s1 + $0x1c] sm:$0xf]
  %v35 = vld [vmem:[%s1 + $0x20] sm:$0xf]
  %v36 = vld [vmem:[%s1 + $0x24] sm:$0xf]
  %v37 = vld [vmem:[%s1 + $0x28] sm:$0xf]
  %v38 = vld [vmem:[%s1 + $0x2c] sm:$0xf]
  %v39 = vld [vmem:[%s1 + $0x30] sm:$0xf]
  %v40 = vld [vmem:[%s1 + $0x34] sm:$0xf]
  %v41 = vld [vmem:[%s1 + $0x38] sm:$0xf]
  %v42 = vld [vmem:[%s1 + $0x3c] sm:$0xf]
  %v43 = vld [vmem:[%s1 + $0x40] sm:$0xf]
  %v44 = vld [vmem:[%s1 + $0x44] sm:$0xf]
  %v45 = vld [vmem:[%s1 + $0x48] sm:$0xf]
  %v46 = vld [vmem:[%s1 + $0x4c] sm:$0xf]
  %v47 = vld [vmem:[%s1 + $0x50] sm:$0xf]
  %v48 = vld [vmem:[%s1 + $0x54] sm:$0xf]
  %v49 = vld [vmem:[%s1 + $0x58] sm:$0xf]
  %v50 = vld [vmem:[%s1 + $0x5c] sm:$0xf]
  %v53 = vunpack.c.l.b16 %v25
  %v54 = vunpack.c.l.b16 %v26
  %v55 = vpack.c.b16 %v54, %v53
  %v80 = vunpack.c.l.b16 %v27
  %v81 = vunpack.c.l.b16 %v28
  %v82 = vunpack.c.l.b16 %v29
  %v83 = vunpack.c.l.b16 %v30
  %v84 = vunpack.c.l.b16 %v31
  %v85 = vunpack.c.l.b16 %v32
  %v86 = vunpack.c.l.b16 %v33
  %v87 = vunpack.c.l.b16 %v34
  %v88 = vunpack.c.l.b16 %v35
  %v89 = vunpack.c.l.b16 %v36
  %v90 = vunpack.c.l.b16 %v37
  %v91 = vunpack.c.l.b16 %v38
  %v92 = vunpack.c.l.b16 %v39
  %v93 = vunpack.c.l.b16 %v40
  %v94 = vunpack.c.l.b16 %v41
  %v95 = vunpack.c.l.b16 %v42
  %v96 = vunpack.c.l.b16 %v43
  %v97 = vunpack.c.l.b16 %v44
  %v98 = vunpack.c.l.b16 %v45
  %v99 = vunpack.c.l.b16 %v46
  %v100 = vunpack.c.l.b16 %v47
  %v101 = vunpack.c.l.b16 %v48
  %v102 = vunpack.c.l.b16 %v49
  %v103 = vunpack.c.l.b16 %v50
  %v104 = vpack.c.b16 %v81, %v80
  %v105 = vpack.c.b16 %v83, %v82
  %v106 = vpack.c.b16 %v85, %v84
  %v107 = vpack.c.b16 %v87, %v86
  %v108 = vpack.c.b16 %v89, %v88
  %v109 = vpack.c.b16 %v91, %v90
  %v110 = vpack.c.b16 %v93, %v92
  %v111 = vpack.c.b16 %v95, %v94
  %v112 = vpack.c.b16 %v97, %v96
  %v113 = vpack.c.b16 %v99, %v98
  %v114 = vpack.c.b16 %v101, %v100
  %v115 = vpack.c.b16 %v103, %v102
  %vm116 = vcmask 261120
  %v118 = vsel %vm116, %v55, 0
  %v121 = vsel %vm116, %v104, 0
  %v124 = vsel %vm116, %v105, 0
  %v127 = vsel %vm116, %v106, 0
  %v130 = vsel %vm116, %v107, 0
  %v133 = vsel %vm116, %v108, 0
  %v136 = vsel %vm116, %v109, 0
  %v139 = vsel %vm116, %v110, 0
  %v142 = vsel %vm116, %v111, 0
  %v145 = vsel %vm116, %v112, 0
  %v148 = vsel %vm116, %v113, 0
  %v151 = vsel %vm116, %v114, 0
  %v154 = vsel %vm116, %v115, 0
  %156 = vmatprep.subr.bf16.mxu0 0
  %157 = vmatpush1.bf16.xpose.msra.mxu0 %v121
  %158 = vmatprep.subr.bf16.mxu0 0
  %159 = vmatpush1.bf16.xpose.msra.mxu0 %v124
  %160 = vmatprep.subr.bf16.mxu0 0
  %161 = vmatpush1.bf16.xpose.msra.mxu0 %v127
  %162 = vmatprep.subr.bf16.mxu0 0
  %163 = vmatpush1.bf16.xpose.msra.mxu0 %v130
  %164 = vmatprep.subr.bf16.mxu0 0
  %165 = vmatpush1.bf16.xpose.msra.mxu0 %v133
  %166 = vmatprep.subr.bf16.mxu0 0
  %167 = vmatpush1.bf16.xpose.msra.mxu0 %v136
  %168 = vmatprep.subr.bf16.mxu0 0
  %169 = vmatpush1.bf16.xpose.msra.mxu0 %v139
  %170 = vmatprep.subr.bf16.mxu0 0
  %171 = vmatpush1.bf16.xpose.msra.mxu0 %v142
  %172 = vmatprep.subr.bf16.mxu0 0
  %173 = vmatpush1.bf16.xpose.msra.mxu0 %v145
  %174 = vmatprep.subr.bf16.mxu0 0
  %175 = vmatpush1.bf16.xpose.msra.mxu0 %v148
  %176 = vmatprep.subr.bf16.mxu0 0
  %177 = vmatpush1.bf16.xpose.msra.mxu0 %v151
  %178 = vmatprep.subr.bf16.mxu0 0
  %179 = vmatpush1.bf16.xpose.msra.mxu0 %v154
  %180 = vmatprep.subr.bf16.mxu0 0
  %181 = vmatpush1.bf16.xpose.msra.mxu0 0
  %182 = vmatprep.subr.bf16.mxu0 0
  %183 = vmatpush1.bf16.xpose.msra.mxu0 0
  %184 = vmatprep.subr.bf16.mxu0 0
  %185 = vmatpush1.bf16.xpose.msra.mxu0 0
  %186 = vmatprep.subr.bf16.mxu0 0
  %187 = vmatpush1.bf16.xpose.msra.mxu0 0
  %188 = vmatprep.mubr.bf16.mxu0 0
  %189 = vmatmul.mubr.bf16.gmra.mrb[0].mxu0 %v118
  %v190 = vpop.f32.mrb[0].mxu0
  %v191 = vadd.f32 0.0, %v190
  %v192 = vpop.f32.mrb[0].mxu0
  %v193 = vadd.f32 0.0, %v192
  %v194 = vpop.f32.mrb[0].mxu0
  %v195 = vadd.f32 0.0, %v194
  %v196 = vpop.f32.mrb[0].mxu0
  %v197 = vadd.f32 0.0, %v196
  %198 = vdwg.mxu0
  %v199 = vadd.f32 %v21, %v191
  %v200 = vadd.f32 %v22, %v193
  %v201 = vadd.f32 %v23, %v195
  %v202 = vadd.f32 %v24, %v197
  %203 = vst [vmem:[#allocation2] sm:$0xff] %v199
  %vm204 = vcmask 523264
  %205 = vst.msk [vmem:[#allocation2 + $0x8] sm:$0xff] %vm204, %v200
  %206 = vst [vmem:[#allocation2 + $0x10] sm:$0xff] %v201
  %207 = vst.msk [vmem:[#allocation2 + $0x18] sm:$0xff] %vm204, %v202
  // Predicated region
  $region14: #{attention_forward.3} parent=0 // pred_check
    %p208 = pneg %p12
  $region15: #{attention_forward.3} parent=0 // pred_check_branch
    %210 = sbr.rel (%p208) target = $region17
  $region16: #{attention_forward.3} parent=0 // pred_region
    %v211 = vld [vmem:[#allocation2] sm:$0xff]
    %v212 = vld [vmem:[#allocation2 + $0x8] sm:$0xff]
    %v213 = vld [vmem:[#allocation2 + $0x10] sm:$0xff]
    %v214 = vld [vmem:[#allocation2 + $0x18] sm:$0xff]
    %v215 = vpack.c.bf16 %v213, %v211
    %v216 = vpack.c.bf16 %v214, %v212
    %v219 = vunpack.c.l.b16 %v215
    %v220 = vunpack.c.l.b16 %v216
    %v221 = vunpack.c.h.b16 %v215
    %v222 = vunpack.c.h.b16 %v216
    %v223 = vpack.c.b16 %v220, %v219
    %v224 = vpack.c.b16 %v222, %v221
    %vm227 = vcmask 1043456
    %vm228 = vcmask 523268
    %vm229 = vmor %vm228, %vm227
    %230 = vst.msk [vmem:[%s2] sm:$0xff] %vm229, %v223
    %231 = vst.msk [vmem:[%s2 + $0x8] sm:$0xff] %vm229, %v224
  $region17: #{attention_forward.3} parent=0 // pred_fallthru
    _
  // Predicated region
  $region18: #{attention_forward.3} parent=0 // pred_check
    _
  $region19: #{attention_forward.3} parent=0 // pred_check_branch
    %233 = sbr.rel (0) target = $region21
  $region20: #{attention_forward.3} parent=0 // pred_region
    _
  $region21: #{attention_forward.3} parent=0 // pred_fallthru
    _
  // Predicated region
  $region22: #{attention_forward.3} parent=0 // pred_check
    _
  $region23: #{attention_forward.3} parent=0 // pred_check_branch
    %235 = sbr.rel (0) target = $region25
  $region24: #{attention_forward.3} parent=0 // pred_region
    _
  $region25: #{attention_forward.3} parent=0 // pred_fallthru
    _

// kernel: attention_forward.4
$region0: #{attention_forward.4}
  #allocation0 [shape = 'u32[]', space=smem, size = 0x4, offset = 0x4, fixed_abs, tag = 'smem constant byte address 0x4 - core index']
  #allocation1 [shape = 'u32[144,128]{1,0:T(1,128)}', space=vmem, size = 0x12000, scoped, tag = 'internal scratch']
  #allocation2 [shape = 'f32[4,8,1]{2,1,0:T(8,128)}', space=vmem, size = 0x4000, scoped, tag = 'scratch operand']
  #allocation3 [shape = 'f32[4,8,1]{2,1,0:T(8,128)}', space=vmem, size = 0x4000, scoped, tag = 'scratch operand']
  #allocation4 [shape = 'f32[4,8,16]{2,1,0:T(8,128)}', space=vmem, size = 0x4000, scoped, tag = 'scratch operand']
  %s0 = inlined_call_operand.vmem [shape: bf16[2,4,8,16], index: 0, kind: input, shape index: {}]
  %s1 = inlined_call_operand.vmem [shape: bf16[2,4,8,16], index: 1, kind: input, shape index: {}]
  %s2 = inlined_call_operand.vmem [shape: bf16[2,4,8,16], index: 2, kind: input, shape index: {}]
  %s3 = inlined_call_operand.vmem [shape: bf16[2,4,8,16], index: 3, kind: output, shape index: {}]
  %s4 = sld [smem:[#allocation0]]
  $region53: #{attention_forward.4} parent=0
    _
  %s6 = ssub.s32 1, %s4
  %s7 = scalar_select 0, %s6, %s4
  loop: start=0, step=1, limit=4
  $region2: #{attention_forward.4} parent=0 // loop_pre_header
    _
  $region3: #{attention_forward.4} parent=0 // loop_header
    %s9 = sphi 0, %s13
    %p10 = scmp.ge.s32.totalorder %s9, 4
    %s16 = sphi 0, %s35
    %s17 = sphi 0, %s31
    %s18 = sphi 0, %s27
    %s19 = sphi 0, %s16
    %s20 = sphi 0, %s17
    %s21 = sphi 0, %s18
    %s22 = sphi 0, %s19
    %s23 = sphi 0, %s20
    %s24 = sphi 0, %s21
    %s40 = sphi 0, %s42
    %s43 = sphi 0, %s40
    %s44 = sphi 0, %s43
    %s60 = sphi 0, %s44
    %s68 = sphi 0, %s70
    %s71 = sphi 0, %s68
    %s72 = sphi 0, %s71
    %s88 = sphi 0, %s72
    %s96 = sphi 0, %s98
    %s99 = sphi 0, %s96
    %s100 = sphi 0, %s99
    %s116 = sphi 0, %s100
    %s124 = sphi 0, %s126
    %s127 = sphi 0, %s124
    %s128 = sphi 0, %s127
    %s144 = sphi 0, %s128
  $region4: #{attention_forward.4} parent=0 // loop_header_branch
    %12 = sbr.rel (%p10) target = $region8
  $region5: #{attention_forward.4} parent=0 // loop_body
    %s14 = ssub.s32 %s9, 1
    %s15 = ssub.s32 %s9, 2
    %s25 = sadd.s32 1, %s18
    %p26 = scmp.ge.s32.totalorder %s25, 1
    %s27 = scalar_select %p26, 0, %s25
    %s28 = sadd.s32 1, %s17
    %s29 = scalar_select %p26, %s28, %s17
    %p30 = scmp.ge.s32.totalorder %s29, 1
    %s31 = scalar_select %p30, 0, %s29
    %s32 = sadd.s32 1, %s16
    %s33 = scalar_select %p30, %s32, %s16
    %p34 = scmp.ge.s32.totalorder %s33, 2
    %s35 = scalar_select %p34, 0, %s33
    %s36 = ssub.s32 %s16, %s35
    %s37 = ssub.s32 %s17, %s31
    %s38 = sor.u32 %s36, %s37
    %p39 = scmp.eq.s32.totalorder %s38, 0
    %s41 = sadd.s32 %s40, 1
    %s42 = scalar_select %p39, %s40, %s41
    %p45 = pneg %p39
    %p46 = scmp.eq.s32.totalorder %s9, 1
    %p47 = por %p45, %p46
    %p48 = scmp.ne.s32.totalorder %s40, %s43
    %p49 = scmp.eq.s32.totalorder %s9, 0
    %p50 = por %p48, %p49
    %p51 = scmp.ne.s32.totalorder %s40, %s43
    %p52 = scmp.eq.s32.totalorder %s14, 1
    %p53 = por %p51, %p52
    %p54 = scmp.ne.s32.totalorder %s43, %s44
    %p55 = scmp.eq.s32.totalorder %s14, 0
    %p56 = por %p54, %p55
    %p57 = scmp.ne.s32.totalorder %s43, %s44
    %p58 = scmp.eq.s32.totalorder %s15, 1
    %p59 = por %p57, %p58
    %p61 = scmp.ne.s32.totalorder %s44, %s60
    %p62 = scmp.eq.s32.totalorder %s15, 0
    %p63 = por %p61, %p62
    %s64 = ssub.s32 %s16, %s35
    %s65 = ssub.s32 %s18, %s27
    %s66 = sor.u32 %s64, %s65
    %p67 = scmp.eq.s32.totalorder %s66, 0
    %s69 = sadd.s32 %s68, 1
    %s70 = scalar_select %p67, %s68, %s69
    %p73 = pneg %p67
    %p74 = scmp.eq.s32.totalorder %s9, 1
    %p75 = por %p73, %p74
    %p76 = scmp.ne.s32.totalorder %s68, %s71
    %p77 = scmp.eq.s32.totalorder %s9, 0
    %p78 = por %p76, %p77
    %p79 = scmp.ne.s32.totalorder %s68, %s71
    %p80 = scmp.eq.s32.totalorder %s14, 1
    %p81 = por %p79, %p80
    %p82 = scmp.ne.s32.totalorder %s71, %s72
    %p83 = scmp.eq.s32.totalorder %s14, 0
    %p84 = por %p82, %p83
    %p85 = scmp.ne.s32.totalorder %s71, %s72
    %p86 = scmp.eq.s32.totalorder %s15, 1
    %p87 = por %p85, %p86
    %p89 = scmp.ne.s32.totalorder %s72, %s88
    %p90 = scmp.eq.s32.totalorder %s15, 0
    %p91 = por %p89, %p90
    %s92 = ssub.s32 %s16, %s35
    %s93 = ssub.s32 %s18, %s27
    %s94 = sor.u32 %s92, %s93
    %p95 = scmp.eq.s32.totalorder %s94, 0
    %s97 = sadd.s32 %s96, 1
    %s98 = scalar_select %p95, %s96, %s97
    %p101 = pneg %p95
    %p102 = scmp.eq.s32.totalorder %s9, 1
    %p103 = por %p101, %p102
    %p104 = scmp.ne.s32.totalorder %s96, %s99
    %p105 = scmp.eq.s32.totalorder %s9, 0
    %p106 = por %p104, %p105
    %p107 = scmp.ne.s32.totalorder %s96, %s99
    %p108 = scmp.eq.s32.totalorder %s14, 1
    %p109 = por %p107, %p108
    %p110 = scmp.ne.s32.totalorder %s99, %s100
    %p111 = scmp.eq.s32.totalorder %s14, 0
    %p112 = por %p110, %p111
    %p113 = scmp.ne.s32.totalorder %s99, %s100
    %p114 = scmp.eq.s32.totalorder %s15, 1
    %p115 = por %p113, %p114
    %p117 = scmp.ne.s32.totalorder %s100, %s116
    %p118 = scmp.eq.s32.totalorder %s15, 0
    %p119 = por %p117, %p118
    %s120 = ssub.s32 %s16, %s35
    %s121 = ssub.s32 %s17, %s31
    %s122 = sor.u32 %s120, %s121
    %p123 = scmp.eq.s32.totalorder %s122, 0
    %s125 = sadd.s32 %s124, 1
    %s126 = scalar_select %p123, %s124, %s125
    %p129 = pneg %p123
    %p130 = scmp.eq.s32.totalorder %s9, 1
    %p131 = por %p129, %p130
    %p132 = scmp.ne.s32.totalorder %s124, %s127
    %p133 = scmp.eq.s32.totalorder %s9, 0
    %p134 = por %p132, %p133
    %p135 = scmp.ne.s32.totalorder %s124, %s127
    %p136 = scmp.eq.s32.totalorder %s14, 1
    %p137 = por %p135, %p136
    %p138 = scmp.ne.s32.totalorder %s127, %s128
    %p139 = scmp.eq.s32.totalorder %s14, 0
    %p140 = por %p138, %p139
    %p141 = scmp.ne.s32.totalorder %s127, %s128
    %p142 = scmp.eq.s32.totalorder %s15, 1
    %p143 = por %p141, %p142
    %p145 = scmp.ne.s32.totalorder %s128, %s144
    %p146 = scmp.eq.s32.totalorder %s15, 0
    %p147 = por %p145, %p146
    %p148 = scmp.le.s32.totalorder 1, %s9
    %p149 = scmp.lt.s32.totalorder %s9, 3
    %p150 = pnand %p148, %p149
    %p151 = pneg %p150
    // Predicated region
    $region9: #{attention_forward.4} parent=5 // pred_check
      _
    $region10: #{attention_forward.4} parent=5 // pred_check_branch
      %153 = sbr.rel (%p150) target = $region12
    $region11: #{attention_forward.4} parent=5 // pred_region
      %s154 = ssub.s32 %s9, 1
    $region12: #{attention_forward.4} parent=5 // pred_fallthru
      _
    %p155 = scmp.lt.s32.totalorder %s9, 2
    // Predicated region
    $region13: #{attention_forward.4} parent=5 // pred_check
      %p156 = pneg %p155
    $region14: #{attention_forward.4} parent=5 // pred_check_branch
      %158 = sbr.rel (%p156) target = $region16
    $region15: #{attention_forward.4} parent=5 // pred_region
      // Predicated region
      $region17: #{attention_forward.4} parent=15 // pred_check
        %p159 = pneg %p50
      $region18: #{attention_forward.4} parent=15 // pred_check_branch
        %161 = sbr.rel (%p159) target = $region20
      $region19: #{attention_forward.4} parent=15 // pred_region
        %p162 = scmp.lt.s32.totalorder %s16, 1
        %s163 = scalar_select %p162, %s16, 1
        %p164 = scmp.lt.s32.totalorder %s17, 0
        %s165 = scalar_select %p164, %s17, 0
        %s166 = smul.addr %s163, 4
        %s167 = sadd.s32 %s165, %s166
        %s168 = smul.addr %s167, 4
        %s169 = scalar_lea.vmem %s0, %s168
      $region20: #{attention_forward.4} parent=15 // pred_fallthru
        _
      // Predicated region
      $region21: #{attention_forward.4} parent=15 // pred_check
        %p170 = pneg %p78
      $region22: #{attention_forward.4} parent=15 // pred_check_branch
        %172 = sbr.rel (%p170) target = $region24
      $region23: #{attention_forward.4} parent=15 // pred_region
        %p173 = scmp.lt.s32.totalorder %s16, 1
        %s174 = scalar_select %p173, %s16, 1
        %p175 = scmp.lt.s32.totalorder %s18, 0
        %s176 = scalar_select %p175, %s18, 0
        %s177 = smul.addr %s174, 4
        %s178 = sadd.s32 %s176, %s177
        %s179 = smul.addr %s178, 4
        %s180 = scalar_lea.vmem %s1, %s179
      $region24: #{attention_forward.4} parent=15 // pred_fallthru
        _
      // Predicated region
      $region25: #{attention_forward.4} parent=15 // pred_check
        %p181 = pneg %p106
      $region26: #{attention_forward.4} parent=15 // pred_check_branch
        %183 = sbr.rel (%p181) target = $region28
      $region27: #{attention_forward.4} parent=15 // pred_region
        %p184 = scmp.lt.s32.totalorder %s16, 1
        %s185 = scalar_select %p184, %s16, 1
        %p186 = scmp.lt.s32.totalorder %s18, 0
        %s187 = scalar_select %p186, %s18, 0
        %s188 = smul.addr %s185, 4
        %s189 = sadd.s32 %s187, %s188
        %s190 = smul.addr %s189, 4
        %s191 = scalar_lea.vmem %s2, %s190
      $region28: #{attention_forward.4} parent=15 // pred_fallthru
        _
    $region16: #{attention_forward.4} parent=5 // pred_fallthru
      _
    %p192 = scmp.le.s32.totalorder 1, %s9
    %p193 = scmp.lt.s32.totalorder %s9, 3
    %p194 = pnand %p192, %p193
    %p195 = pneg %p194
    // Predicated region
    $region29: #{attention_forward.4} parent=5 // pred_check
      _
    $region30: #{attention_forward.4} parent=5 // pred_check_branch
      %197 = sbr.rel (%p194) target = $region32
    $region31: #{attention_forward.4} parent=5 // pred_region
      %s198 = ssub.s32 %s9, 1
      %p199 = scmp.lt.s32.totalorder %s19, 1
      %s200 = scalar_select %p199, %s19, 1
      %p201 = scmp.lt.s32.totalorder %s20, 0
      %s202 = scalar_select %p201, %s20, 0
      %s203 = smul.addr %s200, 4
      %s204 = sadd.s32 %s202, %s203
      %s205 = smul.addr %s204, 4
      %s206 = scalar_lea.vmem %s0, %s205
      %p207 = pneg %p56
      %p208 = pneg %p53
      %p209 = scmp.lt.s32.totalorder %s19, 1
      %s210 = scalar_select %p209, %s19, 1
      %p211 = scmp.lt.s32.totalorder %s21, 0
      %s212 = scalar_select %p211, %s21, 0
      %s213 = smul.addr %s210, 4
      %s214 = sadd.s32 %s212, %s213
      %s215 = smul.addr %s214, 4
      %s216 = scalar_lea.vmem %s1, %s215
      %p217 = pneg %p84
      %p218 = pneg %p81
      %p219 = scmp.lt.s32.totalorder %s19, 1
      %s220 = scalar_select %p219, %s19, 1
      %p221 = scmp.lt.s32.totalorder %s21, 0
      %s222 = scalar_select %p221, %s21, 0
      %s223 = smul.addr %s220, 4
      %s224 = sadd.s32 %s222, %s223
      %s225 = smul.addr %s224, 4
      %s226 = scalar_lea.vmem %s2, %s225
      %p227 = pneg %p112
      %p228 = pneg %p109
      %p229 = pneg %p140
      %p230 = pneg %p137
      %p231 = scmp.lt.s32.totalorder %s19, 1
      %s232 = scalar_select %p231, %s19, 1
      %p233 = scmp.lt.s32.totalorder %s20, 0
      %s234 = scalar_select %p233, %s20, 0
      %s235 = smul.addr %s232, 4
      %s236 = sadd.s32 %s234, %s235
      %s237 = smul.addr %s236, 4
      %s238 = scalar_lea.vmem %s3, %s237
      %p239 = scmp.lt.s32.totalorder %s19, 1
      %s240 = scalar_select %p239, %s19, 1
      %p241 = scmp.lt.s32.totalorder %s20, 0
      %s242 = scalar_select %p241, %s20, 0
      %s243 = smul.addr %s240, 4
      %s244 = sadd.s32 %s242, %s243
      %s245 = smul.addr %s244, 4
      %s246 = scalar_lea.vmem %s0, %s245
      %p247 = scmp.lt.s32.totalorder %s19, 1
      %s248 = scalar_select %p247, %s19, 1
      %p249 = scmp.lt.s32.totalorder %s21, 0
      %s250 = scalar_select %p249, %s21, 0
      %s251 = smul.addr %s248, 4
      %s252 = sadd.s32 %s250, %s251
      %s253 = smul.addr %s252, 4
      %s254 = scalar_lea.vmem %s1, %s253
      %p255 = scmp.lt.s32.totalorder %s19, 1
      %s256 = scalar_select %p255, %s19, 1
      %p257 = scmp.lt.s32.totalorder %s21, 0
      %s258 = scalar_select %p257, %s21, 0
      %s259 = smul.addr %s256, 4
      %s260 = sadd.s32 %s258, %s259
      %s261 = smul.addr %s260, 4
      %s262 = scalar_lea.vmem %s2, %s261
      %p263 = scmp.lt.s32.totalorder %s19, 1
      %s264 = scalar_select %p263, %s19, 1
      %p265 = scmp.lt.s32.totalorder %s20, 0
      %s266 = scalar_select %p265, %s20, 0
      %s267 = smul.addr %s264, 4
      %s268 = sadd.s32 %s266, %s267
      %s269 = smul.addr %s268, 4
      %s270 = scalar_lea.vmem %s3, %s269
      %p272 = scmp.eq.s32.totalorder %s21, 0
      // Predicated region
      $region33: #{attention_forward.4} parent=31 // pred_check
        %p273 = pneg %p272
      $region34: #{attention_forward.4} parent=31 // pred_check_branch
        %275 = sbr.rel (%p273) target = $region36
      $region35: #{attention_forward.4} parent=31 // pred_region
        %vm276 = vcmask 7168
        %277 = vst.msk [vmem:[#allocation2] sm:$0xff] %vm276, -inf
        %278 = vst.msk [vmem:[#allocation2 + $0x8] sm:$0xff] %vm276, -inf
        %279 = vst.msk [vmem:[#allocation2 + $0x10] sm:$0xff] %vm276, -inf
        %280 = vst.msk [vmem:[#allocation2 + $0x18] sm:$0xff] %vm276, -inf
        %281 = vst.msk [vmem:[#allocation3] sm:$0xff] %vm276, 0.0
        %282 = vst.msk [vmem:[#allocation3 + $0x8] sm:$0xff] %vm276, 0.0
        %283 = vst.msk [vmem:[#allocation3 + $0x10] sm:$0xff] %vm276, 0.0
        %284 = vst.msk [vmem:[#allocation3 + $0x18] sm:$0xff] %vm276, 0.0
        %vm285 = vcmask 130048
        %286 = vst.msk [vmem:[#allocation4] sm:$0xff] %vm285, 0.0
        %287 = vst.msk [vmem:[#allocation4 + $0x8] sm:$0xff] %vm285, 0.0
        %288 = vst.msk [vmem:[#allocation4 + $0x10] sm:$0xff] %vm285, 0.0
        %289 = vst.msk [vmem:[#allocation4 + $0x18] sm:$0xff] %vm285, 0.0
      $region36: #{attention_forward.4} parent=31 // pred_fallthru
        _
      %v290 = vld [vmem:[%s246] sm:$0xf]
      %v291 = vld [vmem:[%s246 + $0x4] sm:$0xf]
      %v292 = vld [vmem:[%s246 + $0x8] sm:$0xf]
      %v293 = vld [vmem:[%s246 + $0xc] sm:$0xf]
      %v294 = vld [vmem:[%s254] sm:$0xf]
      %v295 = vld [vmem:[%s254 + $0x4] sm:$0xf]
      %v296 = vld [vmem:[%s254 + $0x8] sm:$0xf]
      %v297 = vld [vmem:[%s254 + $0xc] sm:$0xf]
      %v298 = vld [vmem:[%s262] sm:$0xf]
      %v299 = vld [vmem:[%s262 + $0x4] sm:$0xf]
      %v300 = vld [vmem:[%s262 + $0x8] sm:$0xf]
      %v301 = vld [vmem:[%s262 + $0xc] sm:$0xf]
      %vm302 = vcmask 130048
      %v304 = vsel %vm302, %v290, 0
      %v307 = vsel %vm302, %v294, 0
      %309 = vmatprep.subr.bf16.mxu0 0
      %310 = vmatpush1.bf16.xpose.msra.mxu0 %v307
      %311 = vmatprep.subr.bf16.mxu0 0
      %312 = vmatpush1.bf16.xpose.msra.mxu0 0
      %313 = vmatprep.subr.bf16.mxu0 0
      %314 = vmatpush1.bf16.xpose.msra.mxu0 0
      %315 = vmatprep.subr.bf16.mxu0 0
      %316 = vmatpush1.bf16.xpose.msra.mxu0 0
      %317 = vmatprep.subr.bf16.mxu0 0
      %318 = vmatpush1.bf16.xpose.msra.mxu0 0
      %319 = vmatprep.subr.bf16.mxu0 0
      %320 = vmatpush1.bf16.xpose.msra.mxu0 0
      %321 = vmatprep.subr.bf16.mxu0 0
      %322 = vmatpush1.bf16.xpose.msra.mxu0 0
      %323 = vmatprep.subr.bf16.mxu0 0
      %324 = vmatpush1.bf16.xpose.msra.mxu0 0
      %325 = vmatprep.subr.bf16.mxu0 0
      %326 = vmatpush1.bf16.xpose.msra.mxu0 0
      %327 = vmatprep.subr.bf16.mxu0 0
      %328 = vmatpush1.bf16.xpose.msra.mxu0 0
      %329 = vmatprep.subr.bf16.mxu0 0
      %330 = vmatpush1.bf16.xpose.msra.mxu0 0
      %331 = vmatprep.subr.bf16.mxu0 0
      %332 = vmatpush1.bf16.xpose.msra.mxu0 0
      %333 = vmatprep.subr.bf16.mxu0 0
      %334 = vmatpush1.bf16.xpose.msra.mxu0 0
      %335 = vmatprep.subr.bf16.mxu0 0
      %336 = vmatpush1.bf16.xpose.msra.mxu0 0
      %337 = vmatprep.subr.bf16.mxu0 0
      %338 = vmatpush1.bf16.xpose.msra.mxu0 0
      %339 = vmatprep.subr.bf16.mxu0 0
      %340 = vmatpush1.bf16.xpose.msra.mxu0 0
      %341 = vmatprep.mubr.bf16.mxu0 0
      %342 = vmatmul.mubr.bf16.gmra.mrb[0].mxu0 %v304
      %v343 = vpop.f32.mrb[0].mxu0
      %v344 = vadd.f32 0.0, %v343
      %v345 = vpop.f32.mrb[0].mxu0
      %v346 = vpop.f32.mrb[0].mxu0
      %v347 = vpop.f32.mrb[0].mxu0
      %348 = vdwg.mxu0
      %v350 = vsel %vm302, %v291, 0
      %v353 = vsel %vm302, %v295, 0
      %355 = vmatprep.subr.bf16.mxu0 0
      %356 = vmatpush1.bf16.xpose.msra.mxu0 %v353
      %357 = vmatprep.subr.bf16.mxu0 0
      %358 = vmatpush1.bf16.xpose.msra.mxu0 0
      %359 = vmatprep.subr.bf16.mxu0 0
      %360 = vmatpush1.bf16.xpose.msra.mxu0 0
      %361 = vmatprep.subr.bf16.mxu0 0
      %362 = vmatpush1.bf16.xpose.msra.mxu0 0
      %363 = vmatprep.subr.bf16.mxu0 0
      %364 = vmatpush1.bf16.xpose.msra.mxu0 0
      %365 = vmatprep.subr.bf16.mxu0 0
      %366 = vmatpush1.bf16.xpose.msra.mxu0 0
      %367 = vmatprep.subr.bf16.mxu0 0
      %368 = vmatpush1.bf16.xpose.msra.mxu0 0
      %369 = vmatprep.subr.bf16.mxu0 0
      %370 = vmatpush1.bf16.xpose.msra.mxu0 0
      %371 = vmatprep.subr.bf16.mxu0 0
      %372 = vmatpush1.bf16.xpose.msra.mxu0 0
      %373 = vmatprep.subr.bf16.mxu0 0
      %374 = vmatpush1.bf16.xpose.msra.mxu0 0
      %375 = vmatprep.subr.bf16.mxu0 0
      %376 = vmatpush1.bf16.xpose.msra.mxu0 0
      %377 = vmatprep.subr.bf16.mxu0 0
      %378 = vmatpush1.bf16.xpose.msra.mxu0 0
      %379 = vmatprep.subr.bf16.mxu0 0
      %380 = vmatpush1.bf16.xpose.msra.mxu0 0
      %381 = vmatprep.subr.bf16.mxu0 0
      %382 = vmatpush1.bf16.xpose.msra.mxu0 0
      %383 = vmatprep.subr.bf16.mxu0 0
      %384 = vmatpush1.bf16.xpose.msra.mxu0 0
      %385 = vmatprep.subr.bf16.mxu0 0
      %386 = vmatpush1.bf16.xpose.msra.mxu0 0
      %387 = vmatprep.mubr.bf16.mxu0 0
      %388 = vmatmul.mubr.bf16.gmra.mrb[0].mxu0 %v350
      %v389 = vpop.f32.mrb[0].mxu0
      %v390 = vadd.f32 0.0, %v389
      %v391 = vpop.f32.mrb[0].mxu0
      %v392 = vpop.f32.mrb[0].mxu0
      %v393 = vpop.f32.mrb[0].mxu0
      %394 = vdwg.mxu0
      %v396 = vsel %vm302, %v292, 0
      %v399 = vsel %vm302, %v296, 0
      %401 = vmatprep.subr.bf16.mxu0 0
      %402 = vmatpush1.bf16.xpose.msra.mxu0 %v399
      %403 = vmatprep.subr.bf16.mxu0 0
      %404 = vmatpush1.bf16.xpose.msra.mxu0 0
      %405 = vmatprep.subr.bf16.mxu0 0
      %406 = vmatpush1.bf16.xpose.msra.mxu0 0
      %407 = vmatprep.subr.bf16.mxu0 0
      %408 = vmatpush1.bf16.xpose.msra.mxu0 0
      %409 = vmatprep.subr.bf16.mxu0 0
      %410 = vmatpush1.bf16.xpose.msra.mxu0 0
      %411 = vmatprep.subr.bf16.mxu0 0
      %412 = vmatpush1.bf16.xpose.msra.mxu0 0
      %413 = vmatprep.subr.bf16.mxu0 0
      %414 = vmatpush1.bf16.xpose.msra.mxu0 0
      %415 = vmatprep.subr.bf16.mxu0 0
      %416 = vmatpush1.bf16.xpose.msra.mxu0 0
      %417 = vmatprep.subr.bf16.mxu0 0
      %418 = vmatpush1.bf16.xpose.msra.mxu0 0
      %419 = vmatprep.subr.bf16.mxu0 0
      %420 = vmatpush1.bf16.xpose.msra.mxu0 0
      %421 = vmatprep.subr.bf16.mxu0 0
      %422 = vmatpush1.bf16.xpose.msra.mxu0 0
      %423 = vmatprep.subr.bf16.mxu0 0
      %424 = vmatpush1.bf16.xpose.msra.mxu0 0
      %425 = vmatprep.subr.bf16.mxu0 0
      %426 = vmatpush1.bf16.xpose.msra.mxu0 0
      %427 = vmatprep.subr.bf16.mxu0 0
      %428 = vmatpush1.bf16.xpose.msra.mxu0 0
      %429 = vmatprep.subr.bf16.mxu0 0
      %430 = vmatpush1.bf16.xpose.msra.mxu0 0
      %431 = vmatprep.subr.bf16.mxu0 0
      %432 = vmatpush1.bf16.xpose.msra.mxu0 0
      %433 = vmatprep.mubr.bf16.mxu0 0
      %434 = vmatmul.mubr.bf16.gmra.mrb[0].mxu0 %v396
      %v435 = vpop.f32.mrb[0].mxu0
      %v436 = vadd.f32 0.0, %v435
      %v437 = vpop.f32.mrb[0].mxu0
      %v438 = vpop.f32.mrb[0].mxu0
      %v439 = vpop.f32.mrb[0].mxu0
      %440 = vdwg.mxu0
      %v442 = vsel %vm302, %v293, 0
      %v445 = vsel %vm302, %v297, 0
      %447 = vmatprep.subr.bf16.mxu0 0
      %448 = vmatpush1.bf16.xpose.msra.mxu0 %v445
      %449 = vmatprep.subr.bf16.mxu0 0
      %450 = vmatpush1.bf16.xpose.msra.mxu0 0
      %451 = vmatprep.subr.bf16.mxu0 0
      %452 = vmatpush1.bf16.xpose.msra.mxu0 0
      %453 = vmatprep.subr.bf16.mxu0 0
      %454 = vmatpush1.bf16.xpose.msra.mxu0 0
      %455 = vmatprep.subr.bf16.mxu0 0
      %456 = vmatpush1.bf16.xpose.msra.mxu0 0
      %457 = vmatprep.subr.bf16.mxu0 0
      %458 = vmatpush1.bf16.xpose.msra.mxu0 0
      %459 = vmatprep.subr.bf16.mxu0 0
      %460 = vmatpush1.bf16.xpose.msra.mxu0 0
      %461 = vmatprep.subr.bf16.mxu0 0
      %462 = vmatpush1.bf16.xpose.msra.mxu0 0
      %463 = vmatprep.subr.bf16.mxu0 0
      %464 = vmatpush1.bf16.xpose.msra.mxu0 0
      %465 = vmatprep.subr.bf16.mxu0 0
      %466 = vmatpush1.bf16.xpose.msra.mxu0 0
      %467 = vmatprep.subr.bf16.mxu0 0
      %468 = vmatpush1.bf16.xpose.msra.mxu0 0
      %469 = vmatprep.subr.bf16.mxu0 0
      %470 = vmatpush1.bf16.xpose.msra.mxu0 0
      %471 = vmatprep.subr.bf16.mxu0 0
      %472 = vmatpush1.bf16.xpose.msra.mxu0 0
      %473 = vmatprep.subr.bf16.mxu0 0
      %474 = vmatpush1.bf16.xpose.msra.mxu0 0
      %475 = vmatprep.subr.bf16.mxu0 0
      %476 = vmatpush1.bf16.xpose.msra.mxu0 0
      %477 = vmatprep.subr.bf16.mxu0 0
      %478 = vmatpush1.bf16.xpose.msra.mxu0 0
      %479 = vmatprep.mubr.bf16.mxu0 0
      %480 = vmatmul.mubr.bf16.gmra.mrb[0].mxu0 %v442
      %v481 = vpop.f32.mrb[0].mxu0
      %v482 = vadd.f32 0.0, %v481
      %v483 = vpop.f32.mrb[0].mxu0
      %v484 = vpop.f32.mrb[0].mxu0
      %v485 = vpop.f32.mrb[0].mxu0
      %486 = vdwg.mxu0
      %v487 = vld [vmem:[#allocation2] sm:$0xff]
      %v488 = vld [vmem:[#allocation2 + $0x8] sm:$0xff]
      %v489 = vld [vmem:[#allocation2 + $0x10] sm:$0xff]
      %v490 = vld [vmem:[#allocation2 + $0x18] sm:$0xff]
      %vm491 = vcmask 64512
      %v492 = vsel %vm491, %v344, -inf
      %493 = vmax.xlane.f32.xlu0 %v492
      %v494 = vpop.xlane.xlu0 %493
      %v495 = vsel %vm491, %v390, -inf
      %496 = vmax.xlane.f32.xlu0 %v495
      %v497 = vpop.xlane.xlu0 %496
      %v498 = vsel %vm491, %v436, -inf
      %499 = vmax.xlane.f32.xlu0 %v498
      %v500 = vpop.xlane.xlu0 %499
      %v501 = vsel %vm491, %v482, -inf
      %502 = vmax.xlane.f32.xlu0 %v501
      %v503 = vpop.xlane.xlu0 %502
      %v504 = vmax.f32 %v487, %v494
      %v505 = vmax.f32 %v488, %v497
      %v506 = vmax.f32 %v489, %v500
      %v507 = vmax.f32 %v490, %v503
      %v508 = vsub.f32 %v487, %v504
      %v509 = vsub.f32 %v488, %v505
      %v510 = vsub.f32 %v489, %v506
      %v511 = vsub.f32 %v490, %v507
      %v512 = vmul.f32 %v508, 1.442695
      %v513 = vpow.pop %v512
      %v514 = vmul.f32 %v509, 1.442695
      %v515 = vpow.pop %v514
      %v516 = vmul.f32 %v510, 1.442695
      %v517 = vpow.pop %v516
      %v518 = vmul.f32 %v511, 1.442695
      %v519 = vpow.pop %v518
      %521 = vset.pattern.permute.xlu0 0
      %522 = vperm.xlu0 %521, %v504
      %v523 = vpop.permute.xlu0 %522
      %526 = vset.pattern.permute.xlu0 0
      %527 = vperm.xlu0 %526, %v505
      %v528 = vpop.permute.xlu0 %527
      %531 = vset.pattern.permute.xlu0 0
      %532 = vperm.xlu0 %531, %v506
      %v533 = vpop.permute.xlu0 %532
      %536 = vset.pattern.permute.xlu0 0
      %537 = vperm.xlu0 %536, %v507
      %v538 = vpop.permute.xlu0 %537
      %v540 = vsub.f32 %v344, %v523
      %v541 = vsub.f32 %v390, %v528
      %v542 = vsub.f32 %v436, %v533
      %v543 = vsub.f32 %v482, %v538
      %v544 = vmul.f32 %v540, 1.442695
      %v545 = vpow.pop %v544
      %v546 = vmul.f32 %v541, 1.442695
      %v547 = vpow.pop %v546
      %v548 = vmul.f32 %v542, 1.442695
      %v549 = vpow.pop %v548
      %v550 = vmul.f32 %v543, 1.442695
      %v551 = vpow.pop %v550
      %v552 = vld [vmem:[#allocation3] sm:$0xff]
      %v553 = vld [vmem:[#allocation3 + $0x8] sm:$0xff]
      %v554 = vld [vmem:[#allocation3 + $0x10] sm:$0xff]
      %v555 = vld [vmem:[#allocation3 + $0x18] sm:$0xff]
      %v556 = vmul.f32 %v513, %v552
      %v557 = vmul.f32 %v515, %v553
      %v558 = vmul.f32 %v517, %v554
      %v559 = vmul.f32 %v519, %v555
      %v560 = vsel %vm491, %v545, 0.0
      %561 = vadd.xlane.f32.xlu0 %v560
      %v562 = vpop.xlane.xlu0 %561
      %v563 = vsel %vm491, %v547, 0.0
      %564 = vadd.xlane.f32.xlu0 %v563
      %v565 = vpop.xlane.xlu0 %564
      %v566 = vsel %vm491, %v549, 0.0
      %567 = vadd.xlane.f32.xlu0 %v566
      %v568 = vpop.xlane.xlu0 %567
      %v569 = vsel %vm491, %v551, 0.0
      %570 = vadd.xlane.f32.xlu0 %v569
      %v571 = vpop.xlane.xlu0 %570
      %v572 = vadd.f32 %v556, %v562
      %v573 = vadd.f32 %v557, %v565
      %v574 = vadd.f32 %v558, %v568
      %v575 = vadd.f32 %v559, %v571
      %vm576 = vcmask 7168
      %577 = vst.msk [vmem:[#allocation3] sm:$0xff] %vm576, %v572
      %578 = vst.msk [vmem:[#allocation3 + $0x8] sm:$0xff] %vm576, %v573
      %579 = vst.msk [vmem:[#allocation3 + $0x10] sm:$0xff] %vm576, %v574
      %580 = vst.msk [vmem:[#allocation3 + $0x18] sm:$0xff] %vm576, %v575
      %v581 = vld [vmem:[#allocation4] sm:$0xff]
      %v582 = vld [vmem:[#allocation4 + $0x8] sm:$0xff]
      %v583 = vld [vmem:[#allocation4 + $0x10] sm:$0xff]
      %v584 = vld [vmem:[#allocation4 + $0x18] sm:$0xff]
      %586 = vset.pattern.permute.xlu0 0
      %587 = vperm.xlu0 %586, %v513
      %v588 = vpop.permute.xlu0 %587
      %591 = vset.pattern.permute.xlu0 0
      %592 = vperm.xlu0 %591, %v515
      %v593 = vpop.permute.xlu0 %592
      %596 = vset.pattern.permute.xlu0 0
      %597 = vperm.xlu0 %596, %v517
      %v598 = vpop.permute.xlu0 %597
      %601 = vset.pattern.permute.xlu0 0
      %602 = vperm.xlu0 %601, %v519
      %v603 = vpop.permute.xlu0 %602
      %v605 = vmul.f32 %v588, %v581
      %v606 = vmul.f32 %v593, %v582
      %v607 = vmul.f32 %v598, %v583
      %v608 = vmul.f32 %v603, %v584
      %v609 = vpack.c.bf16 %v545, %v545
      %v610 = vpack.c.bf16 %v547, %v547
      %v611 = vpack.c.bf16 %v549, %v549
      %v612 = vpack.c.bf16 %v551, %v551
      %v614 = vsel %vm491, %v609, 0
      %vm616 = vcmask 1043456
      %v618 = vsel %vm616, %v298, 0
      %620 = vmatprep.subr.bf16.mxu0 0
      %621 = vmatpush1.bf16.msra.mxu0 %v618
      %622 = vmatprep.subr.bf16.mxu0 0
      %623 = vmatpush1.bf16.msra.mxu0 0
      %624 = vmatprep.subr.bf16.mxu0 0
      %625 = vmatpush1.bf16.msra.mxu0 0
      %626 = vmatprep.subr.bf16.mxu0 0
      %627 = vmatpush1.bf16.msra.mxu0 0
      %628 = vmatprep.subr.bf16.mxu0 0
      %629 = vmatpush1.bf16.msra.mxu0 0
      %630 = vmatprep.subr.bf16.mxu0 0
      %631 = vmatpush1.bf16.msra.mxu0 0
      %632 = vmatprep.subr.bf16.mxu0 0
      %633 = vmatpush1.bf16.msra.mxu0 0
      %634 = vmatprep.subr.bf16.mxu0 0
      %635 = vmatpush1.bf16.msra.mxu0 0
      %636 = vmatprep.subr.bf16.mxu0 0
      %637 = vmatpush1.bf16.msra.mxu0 0
      %638 = vmatprep.subr.bf16.mxu0 0
      %639 = vmatpush1.bf16.msra.mxu0 0
      %640 = vmatprep.subr.bf16.mxu0 0
      %641 = vmatpush1.bf16.msra.mxu0 0
      %642 = vmatprep.subr.bf16.mxu0 0
      %643 = vmatpush1.bf16.msra.mxu0 0
      %644 = vmatprep.subr.bf16.mxu0 0
      %645 = vmatpush1.bf16.msra.mxu0 0
      %646 = vmatprep.subr.bf16.mxu0 0
      %647 = vmatpush1.bf16.msra.mxu0 0
      %648 = vmatprep.subr.bf16.mxu0 0
      %649 = vmatpush1.bf16.msra.mxu0 0
      %650 = vmatprep.subr.bf16.mxu0 0
      %651 = vmatpush1.bf16.msra.mxu0 0
      %652 = vmatprep.mubr.bf16.mxu0 0
      %653 = vmatmul.mubr.bf16.gmra.mrb[0].mxu0 %v614
      %v654 = vpop.f32.mrb[0].mxu0
      %v655 = vadd.f32 0.0, %v654
      %v656 = vpop.f32.mrb[0].mxu0
      %v657 = vpop.f32.mrb[0].mxu0
      %v658 = vpop.f32.mrb[0].mxu0
      %659 = vdwg.mxu0
      %v661 = vsel %vm491, %v610, 0
      %v664 = vsel %vm616, %v299, 0
      %666 = vmatprep.subr.bf16.mxu0 0
      %667 = vmatpush1.bf16.msra.mxu0 %v664
      %668 = vmatprep.subr.bf16.mxu0 0
      %669 = vmatpush1.bf16.msra.mxu0 0
      %670 = vmatprep.subr.bf16.mxu0 0
      %671 = vmatpush1.bf16.msra.mxu0 0
      %672 = vmatprep.subr.bf16.mxu0 0
      %673 = vmatpush1.bf16.msra.mxu0 0
      %674 = vmatprep.subr.bf16.mxu0 0
      %675 = vmatpush1.bf16.msra.mxu0 0
      %676 = vmatprep.subr.bf16.mxu0 0
      %677 = vmatpush1.bf16.msra.mxu0 0
      %678 = vmatprep.subr.bf16.mxu0 0
      %679 = vmatpush1.bf16.msra.mxu0 0
      %680 = vmatprep.subr.bf16.mxu0 0
      %681 = vmatpush1.bf16.msra.mxu0 0
      %682 = vmatprep.subr.bf16.mxu0 0
      %683 = vmatpush1.bf16.msra.mxu0 0
      %684 = vmatprep.subr.bf16.mxu0 0
      %685 = vmatpush1.bf16.msra.mxu0 0
      %686 = vmatprep.subr.bf16.mxu0 0
      %687 = vmatpush1.bf16.msra.mxu0 0
      %688 = vmatprep.subr.bf16.mxu0 0
      %689 = vmatpush1.bf16.msra.mxu0 0
      %690 = vmatprep.subr.bf16.mxu0 0
      %691 = vmatpush1.bf16.msra.mxu0 0
      %692 = vmatprep.subr.bf16.mxu0 0
      %693 = vmatpush1.bf16.msra.mxu0 0
      %694 = vmatprep.subr.bf16.mxu0 0
      %695 = vmatpush1.bf16.msra.mxu0 0
      %696 = vmatprep.subr.bf16.mxu0 0
      %697 = vmatpush1.bf16.msra.mxu0 0
      %698 = vmatprep.mubr.bf16.mxu0 0
      %699 = vmatmul.mubr.bf16.gmra.mrb[0].mxu0 %v661
      %v700 = vpop.f32.mrb[0].mxu0
      %v701 = vadd.f32 0.0, %v700
      %v702 = vpop.f32.mrb[0].mxu0
      %v703 = vpop.f32.mrb[0].mxu0
      %v704 = vpop.f32.mrb[0].mxu0
      %705 = vdwg.mxu0
      %v707 = vsel %vm491, %v611, 0
      %v710 = vsel %vm616, %v300, 0
      %712 = vmatprep.subr.bf16.mxu0 0
      %713 = vmatpush1.bf16.msra.mxu0 %v710
      %714 = vmatprep.subr.bf16.mxu0 0
      %715 = vmatpush1.bf16.msra.mxu0 0
      %716 = vmatprep.subr.bf16.mxu0 0
      %717 = vmatpush1.bf16.msra.mxu0 0
      %718 = vmatprep.subr.bf16.mxu0 0
      %719 = vmatpush1.bf16.msra.mxu0 0
      %720 = vmatprep.subr.bf16.mxu0 0
      %721 = vmatpush1.bf16.msra.mxu0 0
      %722 = vmatprep.subr.bf16.mxu0 0
      %723 = vmatpush1.bf16.msra.mxu0 0
      %724 = vmatprep.subr.bf16.mxu0 0
      %725 = vmatpush1.bf16.msra.mxu0 0
      %726 = vmatprep.subr.bf16.mxu0 0
      %727 = vmatpush1.bf16.msra.mxu0 0
      %728 = vmatprep.subr.bf16.mxu0 0
      %729 = vmatpush1.bf16.msra.mxu0 0
      %730 = vmatprep.subr.bf16.mxu0 0
      %731 = vmatpush1.bf16.msra.mxu0 0
      %732 = vmatprep.subr.bf16.mxu0 0
      %733 = vmatpush1.bf16.msra.mxu0 0
      %734 = vmatprep.subr.bf16.mxu0 0
      %735 = vmatpush1.bf16.msra.mxu0 0
      %736 = vmatprep.subr.bf16.mxu0 0
      %737 = vmatpush1.bf16.msra.mxu0 0
      %738 = vmatprep.subr.bf16.mxu0 0
      %739 = vmatpush1.bf16.msra.mxu0 0
      %740 = vmatprep.subr.bf16.mxu0 0
      %741 = vmatpush1.bf16.msra.mxu0 0
      %742 = vmatprep.subr.bf16.mxu0 0
      %743 = vmatpush1.bf16.msra.mxu0 0
      %744 = vmatprep.mubr.bf16.mxu0 0
      %745 = vmatmul.mubr.bf16.gmra.mrb[0].mxu0 %v707
      %v746 = vpop.f32.mrb[0].mxu0
      %v747 = vadd.f32 0.0, %v746
      %v748 = vpop.f32.mrb[0].mxu0
      %v749 = vpop.f32.mrb[0].mxu0
      %v750 = vpop.f32.mrb[0].mxu0
      %751 = vdwg.mxu0
      %v753 = vsel %vm491, %v612, 0
      %v756 = vsel %vm616, %v301, 0
      %758 = vmatprep.subr.bf16.mxu0 0
      %759 = vmatpush1.bf16.msra.mxu0 %v756
      %760 = vmatprep.subr.bf16.mxu0 0
      %761 = vmatpush1.bf16.msra.mxu0 0
      %762 = vmatprep.subr.bf16.mxu0 0
      %763 = vmatpush1.bf16.msra.mxu0 0
      %764 = vmatprep.subr.bf16.mxu0 0
      %765 = vmatpush1.bf16.msra.mxu0 0
      %766 = vmatprep.subr.bf16.mxu0 0
      %767 = vmatpush1.bf16.msra.mxu0 0
      %768 = vmatprep.subr.bf16.mxu0 0
      %769 = vmatpush1.bf16.msra.mxu0 0
      %770 = vmatprep.subr.bf16.mxu0 0
      %771 = vmatpush1.bf16.msra.mxu0 0
      %772 = vmatprep.subr.bf16.mxu0 0
      %773 = vmatpush1.bf16.msra.mxu0 0
      %774 = vmatprep.subr.bf16.mxu0 0
      %775 = vmatpush1.bf16.msra.mxu0 0
      %776 = vmatprep.subr.bf16.mxu0 0
      %777 = vmatpush1.bf16.msra.mxu0 0
      %778 = vmatprep.subr.bf16.mxu0 0
      %779 = vmatpush1.bf16.msra.mxu0 0
      %780 = vmatprep.subr.bf16.mxu0 0
      %781 = vmatpush1.bf16.msra.mxu0 0
      %782 = vmatprep.subr.bf16.mxu0 0
      %783 = vmatpush1.bf16.msra.mxu0 0
      %784 = vmatprep.subr.bf16.mxu0 0
      %785 = vmatpush1.bf16.msra.mxu0 0
      %786 = vmatprep.subr.bf16.mxu0 0
      %787 = vmatpush1.bf16.msra.mxu0 0
      %788 = vmatprep.subr.bf16.mxu0 0
      %789 = vmatpush1.bf16.msra.mxu0 0
      %790 = vmatprep.mubr.bf16.mxu0 0
      %791 = vmatmul.mubr.bf16.gmra.mrb[0].mxu0 %v753
      %v792 = vpop.f32.mrb[0].mxu0
      %v793 = vadd.f32 0.0, %v792
      %v794 = vpop.f32.mrb[0].mxu0
      %v795 = vpop.f32.mrb[0].mxu0
      %v796 = vpop.f32.mrb[0].mxu0
      %797 = vdwg.mxu0
      %v798 = vadd.f32 %v605, %v655
      %v799 = vadd.f32 %v606, %v701
      %v800 = vadd.f32 %v607, %v747
      %v801 = vadd.f32 %v608, %v793
      %802 = vst.msk [vmem:[#allocation4] sm:$0xff] %vm302, %v798
      %803 = vst.msk [vmem:[#allocation4 + $0x8] sm:$0xff] %vm302, %v799
      %804 = vst.msk [vmem:[#allocation4 + $0x10] sm:$0xff] %vm302, %v800
      %805 = vst.msk [vmem:[#allocation4 + $0x18] sm:$0xff] %vm302, %v801
      %806 = vst.msk [vmem:[#allocation2] sm:$0xff] %vm576, %v504
      %807 = vst.msk [vmem:[#allocation2 + $0x8] sm:$0xff] %vm576, %v505
      %808 = vst.msk [vmem:[#allocation2 + $0x10] sm:$0xff] %vm576, %v506
      %809 = vst.msk [vmem:[#allocation2 + $0x18] sm:$0xff] %vm576, %v507
      // Predicated region
      $region37: #{attention_forward.4} parent=31 // pred_check
        %p810 = pneg %p272
      $region38: #{attention_forward.4} parent=31 // pred_check_branch
        %812 = sbr.rel (%p810) target = $region40
      $region39: #{attention_forward.4} parent=31 // pred_region
        %v813 = vld [vmem:[#allocation4] sm:$0xff]
        %v814 = vld [vmem:[#allocation4 + $0x8] sm:$0xff]
        %v815 = vld [vmem:[#allocation4 + $0x10] sm:$0xff]
        %v816 = vld [vmem:[#allocation4 + $0x18] sm:$0xff]
        %v817 = vld [vmem:[#allocation3] sm:$0xff]
        %v818 = vld [vmem:[#allocation3 + $0x8] sm:$0xff]
        %v819 = vld [vmem:[#allocation3 + $0x10] sm:$0xff]
        %v820 = vld [vmem:[#allocation3 + $0x18] sm:$0xff]
        %822 = vset.pattern.permute.xlu0 0
        %823 = vperm.xlu0 %822, %v817
        %v824 = vpop.permute.xlu0 %823
        %827 = vset.pattern.permute.xlu0 0
        %828 = vperm.xlu0 %827, %v818
        %v829 = vpop.permute.xlu0 %828
        %832 = vset.pattern.permute.xlu0 0
        %833 = vperm.xlu0 %832, %v819
        %v834 = vpop.permute.xlu0 %833
        %837 = vset.pattern.permute.xlu0 0
        %838 = vperm.xlu0 %837, %v820
        %v839 = vpop.permute.xlu0 %838
        %v841 = vrcp.pop %v824
        %v842 = vmul.f32 %v813, %v841
        %v843 = vrcp.pop %v829
        %v844 = vmul.f32 %v814, %v843
        %v845 = vrcp.pop %v834
        %v846 = vmul.f32 %v815, %v845
        %v847 = vrcp.pop %v839
        %v848 = vmul.f32 %v816, %v847
        %v849 = vpack.c.bf16 %v842, %v842
        %v850 = vpack.c.bf16 %v844, %v844
        %v851 = vpack.c.bf16 %v846, %v846
        %v852 = vpack.c.bf16 %v848, %v848
        %vm853 = vcmask 125952
        %854 = vst.msk [vmem:[%s270] sm:$0xf] %vm853, %v849
        %855 = vst.msk [vmem:[%s270 + $0x4] sm:$0xf] %vm853, %v850
        %856 = vst.msk [vmem:[%s270 + $0x8] sm:$0xf] %vm853, %v851
        %857 = vst.msk [vmem:[%s270 + $0xc] sm:$0xf] %vm853, %v852
      $region40: #{attention_forward.4} parent=31 // pred_fallthru
        _
      %p858 = scmp.lt.s32.totalorder %s19, 1
      %s859 = scalar_select %p858, %s19, 1
      %p860 = scmp.lt.s32.totalorder %s20, 0
      %s861 = scalar_select %p860, %s20, 0
      %s862 = smul.addr %s859, 4
      %s863 = sadd.s32 %s861, %s862
      %s864 = smul.addr %s863, 4
      %s865 = scalar_lea.vmem %s3, %s864
      // Predicated region
      $region41: #{attention_forward.4} parent=31 // pred_check
        %p866 = pneg %p137
      $region42: #{attention_forward.4} parent=31 // pred_check_branch
        %868 = sbr.rel (%p866) target = $region44
      $region43: #{attention_forward.4} parent=31 // pred_region
        _
      $region44: #{attention_forward.4} parent=31 // pred_fallthru
        _
    $region32: #{attention_forward.4} parent=5 // pred_fallthru
      _
    %p869 = scmp.le.s32.totalorder 2, %s9
    // Predicated region
    $region45: #{attention_forward.4} parent=5 // pred_check
      %p870 = pneg %p869
    $region46: #{attention_forward.4} parent=5 // pred_check_branch
      %872 = sbr.rel (%p870) target = $region48
    $region47: #{attention_forward.4} parent=5 // pred_region
      %s873 = ssub.s32 %s9, 2
      // Predicated region
      $region49: #{attention_forward.4} parent=47 // pred_check
        %p874 = pneg %p143
      $region50: #{attention_forward.4} parent=47 // pred_check_branch
        %876 = sbr.rel (%p874) target = $region52
      $region51: #{attention_forward.4} parent=47 // pred_region
        %p877 = scmp.lt.s32.totalorder %s22, 1
        %s878 = scalar_select %p877, %s22, 1
        %p879 = scmp.lt.s32.totalorder %s23, 0
        %s880 = scalar_select %p879, %s23, 0
        %s881 = smul.addr %s878, 4
        %s882 = sadd.s32 %s880, %s881
        %s883 = smul.addr %s882, 4
        %s884 = scalar_lea.vmem %s3, %s883
      $region52: #{attention_forward.4} parent=47 // pred_fallthru
        _
    $region48: #{attention_forward.4} parent=5 // pred_fallthru
      _
  $region6: #{attention_forward.4} parent=0 // loop_footer
    %s13 = sadd.s32 1, %s9
  $region7: #{attention_forward.4} parent=0 // loop_footer_branch
    %8 = sbr.rel target = $region3
  $region8: #{attention_forward.4} parent=0 // loop_exit
    _

</llo_original>
